<compile_context>
chip_gen: v7x
topology: tpu7x:2x2x1
jax: 0.10.0
libtpu: 0.0.40
codegen_flags: <defaults>
</compile_context>

<pallas_src>
import functools

import jax
import jax.numpy as jnp
from jax import lax
from jax.experimental import pallas as pl
from jax.experimental.pallas import tpu as pltpu

EPS = 1e-5
SUBLANE = 8                        # f32 sublane tile
STAT_LANES = 128                   # lane-padded per-tile stats block -> unmasked stores
MAX_TILE_LANES = 8192              # cap lanes per grid step (VMEM headroom incl. v7x 64 MiB)
VMEM_LIMIT = 32 * 1024 * 1024
MM_DTYPE = jnp.float32             # flip to jnp.bfloat16 at production channel counts


def _pad_to(n, m):
    return ((n + m - 1) // m) * m


def _mm(w, a):
    """MXU matmul with f32 accumulation."""
    return jnp.dot(w.astype(MM_DTYPE), a.astype(MM_DTYPE),
                   preferred_element_type=jnp.float32)


def _stats_block(a):
    """a: (C, L) -> (C, STAT_LANES) with lane0=sum, lane1=sum_sq, rest 0 (unmasked store)."""
    s = jnp.sum(a, axis=1, keepdims=True)
    ss = jnp.sum(a * a, axis=1, keepdims=True)
    z = jnp.zeros((a.shape[0], STAT_LANES - 2), a.dtype)
    return jnp.concatenate([s, ss, z], axis=1)


# --------------------------------- kernels ---------------------------------

def stage1_kernel(x_ref, w1_ref, sc_ref, sh_ref, h1_ref, st_ref):
    # BN1 (folded scale/shift) + ReLU + 1x1 conv; per-tile partial stats of h1 for BN2.
    a = jnp.maximum(x_ref[0] * sc_ref[...] + sh_ref[...], 0.0)        # (Cin_p, L)
    h1 = _mm(w1_ref[...], a)                                          # (Cm_p, L)
    h1_ref[0] = h1
    st_ref[0] = _stats_block(h1)


def stage2_kernel(h1_ref, w3_ref, sc_ref, sh_ref, msk_ref, h2_ref, st_ref, *, W):
    # BN2 + ReLU + 3x3 conv (padding=1).  The 9 taps are lane-rolled (XLU) and border-masked
    # copies of the activation, concatenated IN REGISTERS into the (9*Cm_p, L) matmul operand
    # -- no VMEM im2col scratch.  At production Cm replace the concat + single K=9*Cm matmul
    # with 9 accumulating per-tap matmuls (acc += w3_tap @ masked_tap); v7x's MRB accumulates
    # those in place, and no 9*Cm*L operand ever exists.
    L = h1_ref.shape[2]
    a = jnp.maximum(h1_ref[0] * sc_ref[...] + sh_ref[...], 0.0)       # (Cm_p, L)
    taps = []
    for dh in (-1, 0, 1):
        for dw in (-1, 0, 1):
            t = (dh + 1) * 3 + (dw + 1)
            off = dh * W + dw
            shift = (-off) % L
            shifted = pltpu.roll(a, shift, axis=1) if shift else a
            taps.append(shifted * msk_ref[t])                         # mask zeroes wraps
    col = jnp.concatenate(taps, axis=0)                               # (9*Cm_p, L)
    h2 = _mm(w3_ref[...], col)                                        # (Cm_p, 9Cm_p)@(9Cm_p, L)
    h2_ref[0] = h2
    st_ref[0] = _stats_block(h2)


def stage3_kernel(h2_ref, w5_ref, sc_ref, sh_ref, o_ref):
    # BN3 + ReLU + final 1x1 conv; lane-dense (Cout_p, L) store.
    a = jnp.maximum(h2_ref[0] * sc_ref[...] + sh_ref[...], 0.0)       # (Cm_p, L)
    o_ref[0] = _mm(w5_ref[...], a)                                    # (Cout_p, L)


# --------------------------------- wrapper ---------------------------------

def _tile_spec(c, l):
    # One lane-dense tile (group of whole images) per grid step.
    return pl.BlockSpec((1, c, l), lambda n: (n, 0, 0))


def _full_spec(shape):
    # Whole-array, VMEM-resident block (weights / folded BN params / masks).
    nd = len(shape)
    return pl.BlockSpec(shape, lambda n, nd=nd: (0,) * nd)


def _fold_bn(mean, var, gamma, beta):
    """Fold batch moments + gamma/beta into per-channel scale/shift, shaped (C, 1)."""
    inv = lax.rsqrt(var + EPS)
    scale = gamma * inv
    shift = beta - mean * scale
    return scale[:, None].astype(jnp.float32), shift[:, None].astype(jnp.float32)


def _moments_from_stats(st, count):
    """st: (n_tiles, C, STAT_LANES) per-tile partials -> per-channel (mean, var)."""
    tot = jnp.sum(st, axis=0)                              # (C, STAT_LANES)
    mean = tot[:, 0] / count
    var = jnp.maximum(tot[:, 1] / count - mean * mean, 0.0)
    return mean, var


def _pick_images_per_tile(N, P):
    """Whole images per grid step: as many as fit MAX_TILE_LANES, but keep >=2 grid steps
    when N allows so both v7x TensorCores get work."""
    ipt = max(1, min(N, MAX_TILE_LANES // max(P, 1)))
    while N % ipt:
        ipt -= 1
    if N // ipt < 2 and N >= 2:
        ipt = max(d for d in range(1, N // 2 + 1) if N % d == 0)
    return ipt


@jax.jit
def residual_block(x_nchw, params):
    """x: (N, Cin, H, W) f32.  params = (w1 (Cm,Cin), w3 OIHW (Cm,Cm,3,3), w5 (Cout,Cm),
    g1,b1 (Cin,), g2,b2 (Cm,), g3,b3 (Cm,)).  Returns (N, Cout, H, W) f32."""
    w1, w3, w5, g1, b1, g2, b2, g3, b3 = params
    N, Cin, H, W = x_nchw.shape
    Cm = w1.shape[0]
    Cout = w5.shape[0]
    P = H * W
    count = N * P

    # ---- channel padding to the sublane tile (zeros stay exactly zero end-to-end) ----
    Cin_p, Cm_p, Cout_p = _pad_to(Cin, SUBLANE), _pad_to(Cm, SUBLANE), _pad_to(Cout, SUBLANE)

    def pad_c(v, c_p):
        return jnp.pad(v.astype(jnp.float32), (0, c_p - v.shape[0]))

    g1p, b1p = pad_c(g1, Cin_p), pad_c(b1, Cin_p)
    g2p, b2p = pad_c(g2, Cm_p), pad_c(b2, Cm_p)
    g3p, b3p = pad_c(g3, Cm_p), pad_c(b3, Cm_p)

    w1p = jnp.zeros((Cm_p, Cin_p), jnp.float32).at[:Cm, :Cin].set(w1.astype(jnp.float32))
    w5p = jnp.zeros((Cout_p, Cm_p), jnp.float32).at[:Cout, :Cm].set(w5.astype(jnp.float32))
    w3p = jnp.zeros((Cm_p, Cm_p, 3, 3), jnp.float32).at[:Cm, :Cm].set(w3.astype(jnp.float32))
    # 3x3 weight as (Cm_p, 9*Cm_p), tap-major, matching the in-kernel im2col ordering.
    w3f = jnp.transpose(w3p, (0, 2, 3, 1)).reshape(Cm_p, 9 * Cm_p)

    # ---- pack whole images onto the lane axis: (n_tiles, C_p, L) with L = ipt * H*W ----
    ipt = _pick_images_per_tile(N, P)
    n_tiles = N // ipt
    L = ipt * P

    xt = x_nchw.astype(jnp.float32).reshape(n_tiles, ipt, Cin, P)
    xt = jnp.transpose(xt, (0, 2, 1, 3)).reshape(n_tiles, Cin, L)
    x3 = jnp.pad(xt, ((0, 0), (0, Cin_p - Cin), (0, 0)))

    # Border-validity masks for the 9 taps, built per-image (so cross-image pulls by the
    # flat lane shift stay zeroed) and tiled across the images in a tile.
    rid = jnp.arange(P, dtype=jnp.int32) // W
    cid = jnp.arange(P, dtype=jnp.int32) % W
    masks = []
    for dh in (-1, 0, 1):
        for dw in (-1, 0, 1):
            valid = ((rid + dh >= 0) & (rid + dh < H) &
                     (cid + dw >= 0) & (cid + dw < W)).astype(jnp.float32)
            masks.append(jnp.tile(valid, ipt))
    border = jnp.stack(masks)[:, None, :]                  # (9, 1, L)

    cp = pltpu.CompilerParams(dimension_semantics=("parallel",),
                              vmem_limit_bytes=VMEM_LIMIT)

    # ---- BN1 batch moments of x: plain jnp in the wrapper (no extra kernel launch) ----
    mean1 = jnp.mean(x3, axis=(0, 2))
    var1 = jnp.var(x3, axis=(0, 2))
    sc1, sh1 = _fold_bn(mean1, var1, g1p, b1p)

    # ---- pass 1: BN1 + ReLU + 1x1 conv; per-tile partial stats of h1 ----
    h1, st2 = pl.pallas_call(
        stage1_kernel,
        grid=(n_tiles,),
        in_specs=[_tile_spec(Cin_p, L), _full_spec((Cm_p, Cin_p)),
                  _full_spec((Cin_p, 1)), _full_spec((Cin_p, 1))],
        out_specs=(_tile_spec(Cm_p, L), _tile_spec(Cm_p, STAT_LANES)),
        out_shape=(jax.ShapeDtypeStruct((n_tiles, Cm_p, L), jnp.float32),
                   jax.ShapeDtypeStruct((n_tiles, Cm_p, STAT_LANES), jnp.float32)),
        compiler_params=cp,
    )(x3, w1p, sc1, sh1)
    sc2, sh2 = _fold_bn(*_moments_from_stats(st2, count), g2p, b2p)

    # ---- pass 2: BN2 + ReLU + 3x3 conv (registers-only im2col); partial stats of h2 ----
    h2, st3 = pl.pallas_call(
        functools.partial(stage2_kernel, W=W),
        grid=(n_tiles,),
        in_specs=[_tile_spec(Cm_p, L), _full_spec((Cm_p, 9 * Cm_p)),
                  _full_spec((Cm_p, 1)), _full_spec((Cm_p, 1)),
                  _full_spec((9, 1, L))],
        out_specs=(_tile_spec(Cm_p, L), _tile_spec(Cm_p, STAT_LANES)),
        out_shape=(jax.ShapeDtypeStruct((n_tiles, Cm_p, L), jnp.float32),
                   jax.ShapeDtypeStruct((n_tiles, Cm_p, STAT_LANES), jnp.float32)),
        compiler_params=cp,
    )(h1, w3f, sc2, sh2, border)
    sc3, sh3 = _fold_bn(*_moments_from_stats(st3, count), g3p, b3p)

    # ---- pass 3: BN3 + ReLU + final 1x1 conv (lane-dense output store) ----
    out3 = pl.pallas_call(
        stage3_kernel,
        grid=(n_tiles,),
        in_specs=[_tile_spec(Cm_p, L), _full_spec((Cout_p, Cm_p)),
                  _full_spec((Cm_p, 1)), _full_spec((Cm_p, 1))],
        out_specs=_tile_spec(Cout_p, L),
        out_shape=jax.ShapeDtypeStruct((n_tiles, Cout_p, L), jnp.float32),
        compiler_params=cp,
    )(h2, w5p, sc3, sh3)

    out = out3.reshape(n_tiles, Cout_p, ipt, P)
    out = jnp.transpose(out, (0, 2, 1, 3)).reshape(N, Cout_p, H, W)
    return out[:, :Cout]


# ---------------- plain-JAX reference (correctness check only) ----------------
def reference(x_nchw, params):
    w1, w3, w5, g1, b1, g2, b2, g3, b3 = params

    def bn_relu(h, g, b):  # training-mode BatchNorm2d + ReLU, NCHW
        mean = jnp.mean(h, axis=(0, 2, 3), keepdims=True)
        var = jnp.mean((h - mean) ** 2, axis=(0, 2, 3), keepdims=True)
        hn = (h - mean) * lax.rsqrt(var + EPS)
        hn = hn * g.reshape(1, -1, 1, 1) + b.reshape(1, -1, 1, 1)
        return jnp.maximum(hn, 0.0)

    hp = lax.Precision.HIGHEST
    h = bn_relu(x_nchw, g1, b1)
    h = lax.conv_general_dilated(h, w1[:, :, None, None], (1, 1), 'VALID', precision=hp)
    h = bn_relu(h, g2, b2)
    h = lax.conv_general_dilated(h, w3, (1, 1), ((1, 1), (1, 1)), precision=hp)
    h = bn_relu(h, g3, b3)
    return lax.conv_general_dilated(h, w5[:, :, None, None], (1, 1), 'VALID', precision=hp)


if __name__ == "__main__":
    in_channel, out_channel = 4, 8
    N, H, W = 2, 16, 16
    Cm = out_channel // 2

    key = jax.random.PRNGKey(0)
    ks = jax.random.split(key, 10)

    x = jax.random.normal(ks[0], (N, in_channel, H, W), jnp.float32)
    # Conv weights in PyTorch layouts: 1x1 as (Cout, Cin), 3x3 as OIHW.
    w1 = 0.2 * jax.random.normal(ks[1], (Cm, in_channel), jnp.float32)
    w3 = 0.2 * jax.random.normal(ks[2], (Cm, Cm, 3, 3), jnp.float32)
    w5 = 0.2 * jax.random.normal(ks[3], (out_channel, Cm), jnp.float32)
    # BatchNorm affine params.
    g1 = 1.0 + 0.1 * jax.random.normal(ks[4], (in_channel,), jnp.float32)
    b1 = 0.1 * jax.random.normal(ks[5], (in_channel,), jnp.float32)
    g2 = 1.0 + 0.1 * jax.random.normal(ks[6], (Cm,), jnp.float32)
    b2 = 0.1 * jax.random.normal(ks[7], (Cm,), jnp.float32)
    g3 = 1.0 + 0.1 * jax.random.normal(ks[8], (Cm,), jnp.float32)
    b3 = 0.1 * jax.random.normal(ks[9], (Cm,), jnp.float32)

    params = (w1, w3, w5, g1, b1, g2, b2, g3, b3)

    out = jax.block_until_ready(residual_block(x, params))
    assert out.shape == (N, out_channel, H, W), out.shape

    ref = jax.block_until_ready(reference(x, params))
    err = float(jnp.max(jnp.abs(out - ref)))
    assert jnp.allclose(out, ref, atol=2e-3, rtol=2e-3), err

    print("KERNEL_OK")
</pallas_src>

<mosaic_0001>
module attributes {stable_mosaic.version = 11 : i64} {
  func.func @stage2_kernel(%arg0: i32, %arg1: memref<1x8x256xf32, #tpu.memory_space<vmem>>, %arg2: memref<8x72xf32, #tpu.memory_space<vmem>>, %arg3: memref<8x1xf32, #tpu.memory_space<vmem>>, %arg4: memref<8x1xf32, #tpu.memory_space<vmem>>, %arg5: memref<9x1x256xf32, #tpu.memory_space<vmem>>, %arg6: memref<1x8x256xf32, #tpu.memory_space<vmem>>, %arg7: memref<1x8x128xf32, #tpu.memory_space<vmem>>) attributes {dimension_semantics = [#tpu.dimension_semantics<parallel>], iteration_bounds = array<i64: 2>, scalar_prefetch = 0 : i64, scratch_operands = 0 : i64, tpu.core_type = #tpu.core_type<tc>, window_params = [{transform_indices = @transform_0, window_bounds = array<i64: 1, 8, 256>}, {pipeline_mode = #tpu.pipeline_mode<synchronous>, transform_indices = @transform_1, window_bounds = array<i64: 8, 72>}, {pipeline_mode = #tpu.pipeline_mode<synchronous>, transform_indices = @transform_2, window_bounds = array<i64: 8, 1>}, {pipeline_mode = #tpu.pipeline_mode<synchronous>, transform_indices = @transform_3, window_bounds = array<i64: 8, 1>}, {pipeline_mode = #tpu.pipeline_mode<synchronous>, transform_indices = @transform_4, window_bounds = array<i64: 9, 1, 256>}, {transform_indices = @transform_5, window_bounds = array<i64: 1, 8, 256>}, {transform_indices = @transform_6, window_bounds = array<i64: 1, 8, 128>}]} {
    %c0 = arith.constant 0 : index
    %c0_0 = arith.constant 0 : index
    %c0_1 = arith.constant 0 : index
    %0 = vector.load %arg1[%c0, %c0_0, %c0_1] : memref<1x8x256xf32, #tpu.memory_space<vmem>>, vector<1x8x256xf32>
    %1 = vector.shape_cast %0 : vector<1x8x256xf32> to vector<8x256xf32>
    %c0_2 = arith.constant 0 : index
    %c0_3 = arith.constant 0 : index
    %2 = vector.load %arg3[%c0_2, %c0_3] : memref<8x1xf32, #tpu.memory_space<vmem>>, vector<8x1xf32>
    %3 = vector.broadcast %2 : vector<8x1xf32> to vector<8x256xf32>
    %4 = arith.mulf %1, %3 : vector<8x256xf32>
    %c0_4 = arith.constant 0 : index
    %c0_5 = arith.constant 0 : index
    %5 = vector.load %arg4[%c0_4, %c0_5] : memref<8x1xf32, #tpu.memory_space<vmem>>, vector<8x1xf32>
    %6 = vector.broadcast %5 : vector<8x1xf32> to vector<8x256xf32>
    %7 = arith.addf %4, %6 : vector<8x256xf32>
    %cst = arith.constant 0.000000e+00 : f32
    %8 = vector.broadcast %cst : f32 to vector<8x256xf32>
    %9 = arith.maximumf %7, %8 : vector<8x256xf32>
    %c17_i32 = arith.constant 17 : i32
    %10 = tpu.dynamic_rotate %9 by %c17_i32 dim 1 : vector<8x256xf32>, i32 -> vector<8x256xf32>
    %c0_6 = arith.constant 0 : index
    %c0_7 = arith.constant 0 : index
    %c0_8 = arith.constant 0 : index
    %11 = vector.load %arg5[%c0_6, %c0_7, %c0_8] : memref<9x1x256xf32, #tpu.memory_space<vmem>>, vector<1x1x256xf32>
    %12 = vector.shape_cast %11 : vector<1x1x256xf32> to vector<1x256xf32>
    %13 = vector.broadcast %12 : vector<1x256xf32> to vector<8x256xf32>
    %14 = arith.mulf %10, %13 : vector<8x256xf32>
    %c16_i32 = arith.constant 16 : i32
    %15 = tpu.dynamic_rotate %9 by %c16_i32 dim 1 : vector<8x256xf32>, i32 -> vector<8x256xf32>
    %c1 = arith.constant 1 : index
    %c0_9 = arith.constant 0 : index
    %c0_10 = arith.constant 0 : index
    %16 = vector.load %arg5[%c1, %c0_9, %c0_10] : memref<9x1x256xf32, #tpu.memory_space<vmem>>, vector<1x1x256xf32>
    %17 = vector.shape_cast %16 : vector<1x1x256xf32> to vector<1x256xf32>
    %18 = vector.broadcast %17 : vector<1x256xf32> to vector<8x256xf32>
    %19 = arith.mulf %15, %18 : vector<8x256xf32>
    %c15_i32 = arith.constant 15 : i32
    %20 = tpu.dynamic_rotate %9 by %c15_i32 dim 1 : vector<8x256xf32>, i32 -> vector<8x256xf32>
    %c2 = arith.constant 2 : index
    %c0_11 = arith.constant 0 : index
    %c0_12 = arith.constant 0 : index
    %21 = vector.load %arg5[%c2, %c0_11, %c0_12] : memref<9x1x256xf32, #tpu.memory_space<vmem>>, vector<1x1x256xf32>
    %22 = vector.shape_cast %21 : vector<1x1x256xf32> to vector<1x256xf32>
    %23 = vector.broadcast %22 : vector<1x256xf32> to vector<8x256xf32>
    %24 = arith.mulf %20, %23 : vector<8x256xf32>
    %c1_i32 = arith.constant 1 : i32
    %25 = tpu.dynamic_rotate %9 by %c1_i32 dim 1 : vector<8x256xf32>, i32 -> vector<8x256xf32>
    %c3 = arith.constant 3 : index
    %c0_13 = arith.constant 0 : index
    %c0_14 = arith.constant 0 : index
    %26 = vector.load %arg5[%c3, %c0_13, %c0_14] : memref<9x1x256xf32, #tpu.memory_space<vmem>>, vector<1x1x256xf32>
    %27 = vector.shape_cast %26 : vector<1x1x256xf32> to vector<1x256xf32>
    %28 = vector.broadcast %27 : vector<1x256xf32> to vector<8x256xf32>
    %29 = arith.mulf %25, %28 : vector<8x256xf32>
    %c4 = arith.constant 4 : index
    %c0_15 = arith.constant 0 : index
    %c0_16 = arith.constant 0 : index
    %30 = vector.load %arg5[%c4, %c0_15, %c0_16] : memref<9x1x256xf32, #tpu.memory_space<vmem>>, vector<1x1x256xf32>
    %31 = vector.shape_cast %30 : vector<1x1x256xf32> to vector<1x256xf32>
    %32 = vector.broadcast %31 : vector<1x256xf32> to vector<8x256xf32>
    %33 = arith.mulf %9, %32 : vector<8x256xf32>
    %c255_i32 = arith.constant 255 : i32
    %34 = tpu.dynamic_rotate %9 by %c255_i32 dim 1 : vector<8x256xf32>, i32 -> vector<8x256xf32>
    %c5 = arith.constant 5 : index
    %c0_17 = arith.constant 0 : index
    %c0_18 = arith.constant 0 : index
    %35 = vector.load %arg5[%c5, %c0_17, %c0_18] : memref<9x1x256xf32, #tpu.memory_space<vmem>>, vector<1x1x256xf32>
    %36 = vector.shape_cast %35 : vector<1x1x256xf32> to vector<1x256xf32>
    %37 = vector.broadcast %36 : vector<1x256xf32> to vector<8x256xf32>
    %38 = arith.mulf %34, %37 : vector<8x256xf32>
    %c241_i32 = arith.constant 241 : i32
    %39 = tpu.dynamic_rotate %9 by %c241_i32 dim 1 : vector<8x256xf32>, i32 -> vector<8x256xf32>
    %c6 = arith.constant 6 : index
    %c0_19 = arith.constant 0 : index
    %c0_20 = arith.constant 0 : index
    %40 = vector.load %arg5[%c6, %c0_19, %c0_20] : memref<9x1x256xf32, #tpu.memory_space<vmem>>, vector<1x1x256xf32>
    %41 = vector.shape_cast %40 : vector<1x1x256xf32> to vector<1x256xf32>
    %42 = vector.broadcast %41 : vector<1x256xf32> to vector<8x256xf32>
    %43 = arith.mulf %39, %42 : vector<8x256xf32>
    %c240_i32 = arith.constant 240 : i32
    %44 = tpu.dynamic_rotate %9 by %c240_i32 dim 1 : vector<8x256xf32>, i32 -> vector<8x256xf32>
    %c7 = arith.constant 7 : index
    %c0_21 = arith.constant 0 : index
    %c0_22 = arith.constant 0 : index
    %45 = vector.load %arg5[%c7, %c0_21, %c0_22] : memref<9x1x256xf32, #tpu.memory_space<vmem>>, vector<1x1x256xf32>
    %46 = vector.shape_cast %45 : vector<1x1x256xf32> to vector<1x256xf32>
    %47 = vector.broadcast %46 : vector<1x256xf32> to vector<8x256xf32>
    %48 = arith.mulf %44, %47 : vector<8x256xf32>
    %c239_i32 = arith.constant 239 : i32
    %49 = tpu.dynamic_rotate %9 by %c239_i32 dim 1 : vector<8x256xf32>, i32 -> vector<8x256xf32>
    %c8 = arith.constant 8 : index
    %c0_23 = arith.constant 0 : index
    %c0_24 = arith.constant 0 : index
    %50 = vector.load %arg5[%c8, %c0_23, %c0_24] : memref<9x1x256xf32, #tpu.memory_space<vmem>>, vector<1x1x256xf32>
    %51 = vector.shape_cast %50 : vector<1x1x256xf32> to vector<1x256xf32>
    %52 = vector.broadcast %51 : vector<1x256xf32> to vector<8x256xf32>
    %53 = arith.mulf %49, %52 : vector<8x256xf32>
    %54 = tpu.concatenate %14, %19, %24, %29, %33, %38, %43, %48, %53 in 0 : vector<8x256xf32>, vector<8x256xf32>, vector<8x256xf32>, vector<8x256xf32>, vector<8x256xf32>, vector<8x256xf32>, vector<8x256xf32>, vector<8x256xf32>, vector<8x256xf32> -> vector<72x256xf32>
    %c0_25 = arith.constant 0 : index
    %c0_26 = arith.constant 0 : index
    %55 = vector.load %arg2[%c0_25, %c0_26] : memref<8x72xf32, #tpu.memory_space<vmem>>, vector<8x72xf32>
    %cst_27 = arith.constant dense<0.000000e+00> : vector<8x256xf32>
    %56 = tpu.matmul %55, %54, %cst_27 {dimension_numbers = #tpu.dot_dimension_numbers<[1], [0], [0], [1], [0, 0, 1, 1], [], []>} : vector<8x72xf32>, vector<72x256xf32>, vector<8x256xf32> -> vector<8x256xf32>
    %c0_28 = arith.constant 0 : index
    %c0_29 = arith.constant 0 : index
    %c0_30 = arith.constant 0 : index
    %57 = vector.load %arg6[%c0_28, %c0_29, %c0_30] : memref<1x8x256xf32, #tpu.memory_space<vmem>>, vector<1x8x256xf32>
    %58 = vector.shape_cast %57 : vector<1x8x256xf32> to vector<8x256xf32>
    %59 = vector.shape_cast %56 : vector<8x256xf32> to vector<1x8x256xf32>
    tpu.vector_store %arg6[%c0_28, %c0_29, %c0_30], %59 {strides = array<i32>} : memref<1x8x256xf32, #tpu.memory_space<vmem>>, vector<1x8x256xf32>,
    %cst_31 = arith.constant dense<0.000000e+00> : vector<8xf32>
    %60 = vector.multi_reduction <add>, %56, %cst_31 [1] : vector<8x256xf32> to vector<8xf32>
    %61 = vector.shape_cast %60 : vector<8xf32> to vector<8x1xf32>
    %62 = arith.mulf %56, %56 : vector<8x256xf32>
    %cst_32 = arith.constant dense<0.000000e+00> : vector<8xf32>
    %63 = vector.multi_reduction <add>, %62, %cst_32 [1] : vector<8x256xf32> to vector<8xf32>
    %64 = vector.shape_cast %63 : vector<8xf32> to vector<8x1xf32>
    %cst_33 = arith.constant 0.000000e+00 : f32
    %65 = vector.broadcast %cst_33 : f32 to vector<8x126xf32>
    %66 = tpu.concatenate %61, %64, %65 in 1 : vector<8x1xf32>, vector<8x1xf32>, vector<8x126xf32> -> vector<8x128xf32>
    %c0_34 = arith.constant 0 : index
    %c0_35 = arith.constant 0 : index
    %c0_36 = arith.constant 0 : index
    %67 = vector.load %arg7[%c0_34, %c0_35, %c0_36] : memref<1x8x128xf32, #tpu.memory_space<vmem>>, vector<1x8x128xf32>
    %68 = vector.shape_cast %67 : vector<1x8x128xf32> to vector<8x128xf32>
    %69 = vector.shape_cast %66 : vector<8x128xf32> to vector<1x8x128xf32>
    tpu.vector_store %arg7[%c0_34, %c0_35, %c0_36], %69 {strides = array<i32>} : memref<1x8x128xf32, #tpu.memory_space<vmem>>, vector<1x8x128xf32>,
    return
  }
  func.func @transform_0(%arg0: i32) -> (i32, i32, i32) {
    %c0_i32 = arith.constant 0 : i32
    %c0_i32_0 = arith.constant 0 : i32
    %c0_i32_1 = arith.constant 0 : i32
    return %arg0, %c0_i32, %c0_i32_0 : i32, i32, i32
  }
  func.func @transform_1(%arg0: i32) -> (i32, i32) {
    %c0_i32 = arith.constant 0 : i32
    %c0_i32_0 = arith.constant 0 : i32
    %c0_i32_1 = arith.constant 0 : i32
    return %c0_i32, %c0_i32_0 : i32, i32
  }
  func.func @transform_2(%arg0: i32) -> (i32, i32) {
    %c0_i32 = arith.constant 0 : i32
    %c0_i32_0 = arith.constant 0 : i32
    %c0_i32_1 = arith.constant 0 : i32
    return %c0_i32, %c0_i32_0 : i32, i32
  }
  func.func @transform_3(%arg0: i32) -> (i32, i32) {
    %c0_i32 = arith.constant 0 : i32
    %c0_i32_0 = arith.constant 0 : i32
    %c0_i32_1 = arith.constant 0 : i32
    return %c0_i32, %c0_i32_0 : i32, i32
  }
  func.func @transform_4(%arg0: i32) -> (i32, i32, i32) {
    %c0_i32 = arith.constant 0 : i32
    %c0_i32_0 = arith.constant 0 : i32
    %c0_i32_1 = arith.constant 0 : i32
    %c0_i32_2 = arith.constant 0 : i32
    return %c0_i32, %c0_i32_0, %c0_i32_1 : i32, i32, i32
  }
  func.func @transform_5(%arg0: i32) -> (i32, i32, i32) {
    %c0_i32 = arith.constant 0 : i32
    %c0_i32_0 = arith.constant 0 : i32
    %c0_i32_1 = arith.constant 0 : i32
    return %arg0, %c0_i32, %c0_i32_0 : i32, i32, i32
  }
  func.func @transform_6(%arg0: i32) -> (i32, i32, i32) {
    %c0_i32 = arith.constant 0 : i32
    %c0_i32_0 = arith.constant 0 : i32
    %c0_i32_1 = arith.constant 0 : i32
    return %arg0, %c0_i32, %c0_i32_0 : i32, i32, i32
  }
}

module attributes {stable_mosaic.version = 11 : i64} {
  func.func @stage1_kernel(%arg0: i32, %arg1: memref<1x8x256xf32, #tpu.memory_space<vmem>>, %arg2: memref<8x8xf32, #tpu.memory_space<vmem>>, %arg3: memref<8x1xf32, #tpu.memory_space<vmem>>, %arg4: memref<8x1xf32, #tpu.memory_space<vmem>>, %arg5: memref<1x8x256xf32, #tpu.memory_space<vmem>>, %arg6: memref<1x8x128xf32, #tpu.memory_space<vmem>>) attributes {dimension_semantics = [#tpu.dimension_semantics<parallel>], iteration_bounds = array<i64: 2>, scalar_prefetch = 0 : i64, scratch_operands = 0 : i64, tpu.core_type = #tpu.core_type<tc>, window_params = [{transform_indices = @transform_0, window_bounds = array<i64: 1, 8, 256>}, {pipeline_mode = #tpu.pipeline_mode<synchronous>, transform_indices = @transform_1, window_bounds = array<i64: 8, 8>}, {pipeline_mode = #tpu.pipeline_mode<synchronous>, transform_indices = @transform_2, window_bounds = array<i64: 8, 1>}, {pipeline_mode = #tpu.pipeline_mode<synchronous>, transform_indices = @transform_3, window_bounds = array<i64: 8, 1>}, {transform_indices = @transform_4, window_bounds = array<i64: 1, 8, 256>}, {transform_indices = @transform_5, window_bounds = array<i64: 1, 8, 128>}]} {
    %c0 = arith.constant 0 : index
    %c0_0 = arith.constant 0 : index
    %c0_1 = arith.constant 0 : index
    %0 = vector.load %arg1[%c0, %c0_0, %c0_1] : memref<1x8x256xf32, #tpu.memory_space<vmem>>, vector<1x8x256xf32>
    %1 = vector.shape_cast %0 : vector<1x8x256xf32> to vector<8x256xf32>
    %c0_2 = arith.constant 0 : index
    %c0_3 = arith.constant 0 : index
    %2 = vector.load %arg3[%c0_2, %c0_3] : memref<8x1xf32, #tpu.memory_space<vmem>>, vector<8x1xf32>
    %3 = vector.broadcast %2 : vector<8x1xf32> to vector<8x256xf32>
    %4 = arith.mulf %1, %3 : vector<8x256xf32>
    %c0_4 = arith.constant 0 : index
    %c0_5 = arith.constant 0 : index
    %5 = vector.load %arg4[%c0_4, %c0_5] : memref<8x1xf32, #tpu.memory_space<vmem>>, vector<8x1xf32>
    %6 = vector.broadcast %5 : vector<8x1xf32> to vector<8x256xf32>
    %7 = arith.addf %4, %6 : vector<8x256xf32>
    %cst = arith.constant 0.000000e+00 : f32
    %8 = vector.broadcast %cst : f32 to vector<8x256xf32>
    %9 = arith.maximumf %7, %8 : vector<8x256xf32>
    %c0_6 = arith.constant 0 : index
    %c0_7 = arith.constant 0 : index
    %10 = vector.load %arg2[%c0_6, %c0_7] : memref<8x8xf32, #tpu.memory_space<vmem>>, vector<8x8xf32>
    %cst_8 = arith.constant dense<0.000000e+00> : vector<8x256xf32>
    %11 = tpu.matmul %10, %9, %cst_8 {dimension_numbers = #tpu.dot_dimension_numbers<[1], [0], [0], [1], [0, 0, 1, 1], [], []>} : vector<8x8xf32>, vector<8x256xf32>, vector<8x256xf32> -> vector<8x256xf32>
    %c0_9 = arith.constant 0 : index
    %c0_10 = arith.constant 0 : index
    %c0_11 = arith.constant 0 : index
    %12 = vector.load %arg5[%c0_9, %c0_10, %c0_11] : memref<1x8x256xf32, #tpu.memory_space<vmem>>, vector<1x8x256xf32>
    %13 = vector.shape_cast %12 : vector<1x8x256xf32> to vector<8x256xf32>
    %14 = vector.shape_cast %11 : vector<8x256xf32> to vector<1x8x256xf32>
    tpu.vector_store %arg5[%c0_9, %c0_10, %c0_11], %14 {strides = array<i32>} : memref<1x8x256xf32, #tpu.memory_space<vmem>>, vector<1x8x256xf32>,
    %cst_12 = arith.constant dense<0.000000e+00> : vector<8xf32>
    %15 = vector.multi_reduction <add>, %11, %cst_12 [1] : vector<8x256xf32> to vector<8xf32>
    %16 = vector.shape_cast %15 : vector<8xf32> to vector<8x1xf32>
    %17 = arith.mulf %11, %11 : vector<8x256xf32>
    %cst_13 = arith.constant dense<0.000000e+00> : vector<8xf32>
    %18 = vector.multi_reduction <add>, %17, %cst_13 [1] : vector<8x256xf32> to vector<8xf32>
    %19 = vector.shape_cast %18 : vector<8xf32> to vector<8x1xf32>
    %cst_14 = arith.constant 0.000000e+00 : f32
    %20 = vector.broadcast %cst_14 : f32 to vector<8x126xf32>
    %21 = tpu.concatenate %16, %19, %20 in 1 : vector<8x1xf32>, vector<8x1xf32>, vector<8x126xf32> -> vector<8x128xf32>
    %c0_15 = arith.constant 0 : index
    %c0_16 = arith.constant 0 : index
    %c0_17 = arith.constant 0 : index
    %22 = vector.load %arg6[%c0_15, %c0_16, %c0_17] : memref<1x8x128xf32, #tpu.memory_space<vmem>>, vector<1x8x128xf32>
    %23 = vector.shape_cast %22 : vector<1x8x128xf32> to vector<8x128xf32>
    %24 = vector.shape_cast %21 : vector<8x128xf32> to vector<1x8x128xf32>
    tpu.vector_store %arg6[%c0_15, %c0_16, %c0_17], %24 {strides = array<i32>} : memref<1x8x128xf32, #tpu.memory_space<vmem>>, vector<1x8x128xf32>,
    return
  }
  func.func @transform_0(%arg0: i32) -> (i32, i32, i32) {
    %c0_i32 = arith.constant 0 : i32
    %c0_i32_0 = arith.constant 0 : i32
    %c0_i32_1 = arith.constant 0 : i32
    return %arg0, %c0_i32, %c0_i32_0 : i32, i32, i32
  }
  func.func @transform_1(%arg0: i32) -> (i32, i32) {
    %c0_i32 = arith.constant 0 : i32
    %c0_i32_0 = arith.constant 0 : i32
    %c0_i32_1 = arith.constant 0 : i32
    return %c0_i32, %c0_i32_0 : i32, i32
  }
  func.func @transform_2(%arg0: i32) -> (i32, i32) {
    %c0_i32 = arith.constant 0 : i32
    %c0_i32_0 = arith.constant 0 : i32
    %c0_i32_1 = arith.constant 0 : i32
    return %c0_i32, %c0_i32_0 : i32, i32
  }
  func.func @transform_3(%arg0: i32) -> (i32, i32) {
    %c0_i32 = arith.constant 0 : i32
    %c0_i32_0 = arith.constant 0 : i32
    %c0_i32_1 = arith.constant 0 : i32
    return %c0_i32, %c0_i32_0 : i32, i32
  }
  func.func @transform_4(%arg0: i32) -> (i32, i32, i32) {
    %c0_i32 = arith.constant 0 : i32
    %c0_i32_0 = arith.constant 0 : i32
    %c0_i32_1 = arith.constant 0 : i32
    return %arg0, %c0_i32, %c0_i32_0 : i32, i32, i32
  }
  func.func @transform_5(%arg0: i32) -> (i32, i32, i32) {
    %c0_i32 = arith.constant 0 : i32
    %c0_i32_0 = arith.constant 0 : i32
    %c0_i32_1 = arith.constant 0 : i32
    return %arg0, %c0_i32, %c0_i32_0 : i32, i32, i32
  }
}

module attributes {stable_mosaic.version = 11 : i64} {
  func.func @stage3_kernel(%arg0: i32, %arg1: memref<1x8x256xf32, #tpu.memory_space<vmem>>, %arg2: memref<8x8xf32, #tpu.memory_space<vmem>>, %arg3: memref<8x1xf32, #tpu.memory_space<vmem>>, %arg4: memref<8x1xf32, #tpu.memory_space<vmem>>, %arg5: memref<1x8x256xf32, #tpu.memory_space<vmem>>) attributes {dimension_semantics = [#tpu.dimension_semantics<parallel>], iteration_bounds = array<i64: 2>, scalar_prefetch = 0 : i64, scratch_operands = 0 : i64, tpu.core_type = #tpu.core_type<tc>, window_params = [{transform_indices = @transform_0, window_bounds = array<i64: 1, 8, 256>}, {pipeline_mode = #tpu.pipeline_mode<synchronous>, transform_indices = @transform_1, window_bounds = array<i64: 8, 8>}, {pipeline_mode = #tpu.pipeline_mode<synchronous>, transform_indices = @transform_2, window_bounds = array<i64: 8, 1>}, {pipeline_mode = #tpu.pipeline_mode<synchronous>, transform_indices = @transform_3, window_bounds = array<i64: 8, 1>}, {transform_indices = @transform_4, window_bounds = array<i64: 1, 8, 256>}]} {
    %c0 = arith.constant 0 : index
    %c0_0 = arith.constant 0 : index
    %c0_1 = arith.constant 0 : index
    %0 = vector.load %arg1[%c0, %c0_0, %c0_1] : memref<1x8x256xf32, #tpu.memory_space<vmem>>, vector<1x8x256xf32>
    %1 = vector.shape_cast %0 : vector<1x8x256xf32> to vector<8x256xf32>
    %c0_2 = arith.constant 0 : index
    %c0_3 = arith.constant 0 : index
    %2 = vector.load %arg3[%c0_2, %c0_3] : memref<8x1xf32, #tpu.memory_space<vmem>>, vector<8x1xf32>
    %3 = vector.broadcast %2 : vector<8x1xf32> to vector<8x256xf32>
    %4 = arith.mulf %1, %3 : vector<8x256xf32>
    %c0_4 = arith.constant 0 : index
    %c0_5 = arith.constant 0 : index
    %5 = vector.load %arg4[%c0_4, %c0_5] : memref<8x1xf32, #tpu.memory_space<vmem>>, vector<8x1xf32>
    %6 = vector.broadcast %5 : vector<8x1xf32> to vector<8x256xf32>
    %7 = arith.addf %4, %6 : vector<8x256xf32>
    %cst = arith.constant 0.000000e+00 : f32
    %8 = vector.broadcast %cst : f32 to vector<8x256xf32>
    %9 = arith.maximumf %7, %8 : vector<8x256xf32>
    %c0_6 = arith.constant 0 : index
    %c0_7 = arith.constant 0 : index
    %10 = vector.load %arg2[%c0_6, %c0_7] : memref<8x8xf32, #tpu.memory_space<vmem>>, vector<8x8xf32>
    %cst_8 = arith.constant dense<0.000000e+00> : vector<8x256xf32>
    %11 = tpu.matmul %10, %9, %cst_8 {dimension_numbers = #tpu.dot_dimension_numbers<[1], [0], [0], [1], [0, 0, 1, 1], [], []>} : vector<8x8xf32>, vector<8x256xf32>, vector<8x256xf32> -> vector<8x256xf32>
    %c0_9 = arith.constant 0 : index
    %c0_10 = arith.constant 0 : index
    %c0_11 = arith.constant 0 : index
    %12 = vector.load %arg5[%c0_9, %c0_10, %c0_11] : memref<1x8x256xf32, #tpu.memory_space<vmem>>, vector<1x8x256xf32>
    %13 = vector.shape_cast %12 : vector<1x8x256xf32> to vector<8x256xf32>
    %14 = vector.shape_cast %11 : vector<8x256xf32> to vector<1x8x256xf32>
    tpu.vector_store %arg5[%c0_9, %c0_10, %c0_11], %14 {strides = array<i32>} : memref<1x8x256xf32, #tpu.memory_space<vmem>>, vector<1x8x256xf32>,
    return
  }
  func.func @transform_0(%arg0: i32) -> (i32, i32, i32) {
    %c0_i32 = arith.constant 0 : i32
    %c0_i32_0 = arith.constant 0 : i32
    %c0_i32_1 = arith.constant 0 : i32
    return %arg0, %c0_i32, %c0_i32_0 : i32, i32, i32
  }
  func.func @transform_1(%arg0: i32) -> (i32, i32) {
    %c0_i32 = arith.constant 0 : i32
    %c0_i32_0 = arith.constant 0 : i32
    %c0_i32_1 = arith.constant 0 : i32
    return %c0_i32, %c0_i32_0 : i32, i32
  }
  func.func @transform_2(%arg0: i32) -> (i32, i32) {
    %c0_i32 = arith.constant 0 : i32
    %c0_i32_0 = arith.constant 0 : i32
    %c0_i32_1 = arith.constant 0 : i32
    return %c0_i32, %c0_i32_0 : i32, i32
  }
  func.func @transform_3(%arg0: i32) -> (i32, i32) {
    %c0_i32 = arith.constant 0 : i32
    %c0_i32_0 = arith.constant 0 : i32
    %c0_i32_1 = arith.constant 0 : i32
    return %c0_i32, %c0_i32_0 : i32, i32
  }
  func.func @transform_4(%arg0: i32) -> (i32, i32, i32) {
    %c0_i32 = arith.constant 0 : i32
    %c0_i32_0 = arith.constant 0 : i32
    %c0_i32_1 = arith.constant 0 : i32
    return %arg0, %c0_i32, %c0_i32_0 : i32, i32, i32
  }
}

</mosaic_0001>

<llo_original>
// kernel: residual_block.5
$region0: #{residual_block.5}
  #allocation0 [shape = 'u32[]', space=smem, size = 0x4, offset = 0x4, fixed_abs, tag = 'smem constant byte address 0x4 - core index']
  #allocation1 [shape = 'u32[144,128]{1,0:T(1,128)}', space=vmem, size = 0x12000, scoped, tag = 'internal scratch']
  %s0 = inlined_call_operand.vmem [shape: f32[2,8,256], index: 0, kind: input, shape index: {}]
  %s1 = inlined_call_operand.vmem [shape: f32[8,8], index: 1, kind: input, shape index: {}]
  %s2 = inlined_call_operand.vmem [shape: f32[8,1], index: 2, kind: input, shape index: {}]
  %s3 = inlined_call_operand.vmem [shape: f32[8,1], index: 3, kind: input, shape index: {}]
  %s4 = inlined_call_operand.vmem [shape: f32[2,8,256], index: 4, kind: output, shape index: {}]
  %s5 = sld [smem:[#allocation0]]
  $region49: #{residual_block.5} parent=0
    _
  %s7 = ssub.s32 1, %s5
  %s8 = scalar_select 0, %s7, %s5
  loop: start=0, step=1, limit=4
  $region2: #{residual_block.5} parent=0 // loop_pre_header
    _
  $region3: #{residual_block.5} parent=0 // loop_header
    %s10 = sphi 0, %s14
    %p11 = scmp.ge.s32.totalorder %s10, 4
    %s20 = sphi 0, %s22
    %s23 = sphi 0, %s20
    %s24 = sphi 0, %s23
    %s40 = sphi 0, %s24
    %s44 = sphi 0, %s44
    %s46 = sphi 0, %s44
    %s47 = sphi 0, %s46
    %s61 = sphi 0, %s47
    %s65 = sphi 0, %s65
    %s67 = sphi 0, %s65
    %s68 = sphi 0, %s67
    %s82 = sphi 0, %s68
    %s86 = sphi 0, %s86
    %s88 = sphi 0, %s86
    %s89 = sphi 0, %s88
    %s103 = sphi 0, %s89
    %s109 = sphi 0, %s111
    %s112 = sphi 0, %s109
    %s113 = sphi 0, %s112
    %s129 = sphi 0, %s113
  $region4: #{residual_block.5} parent=0 // loop_header_branch
    %13 = sbr.rel (%p11) target = $region8
  $region5: #{residual_block.5} parent=0 // loop_body
    %s15 = ssub.s32 %s10, 1
    %s16 = ssub.s32 %s10, 2
    %s17 = sadd.s32 %s10, 1
    %s18 = ssub.s32 %s10, %s17
    %p19 = scmp.eq.s32.totalorder %s18, 0
    %s21 = sadd.s32 %s20, 1
    %s22 = scalar_select %p19, %s20, %s21
    %p25 = pneg %p19
    %p26 = scmp.eq.s32.totalorder %s10, 1
    %p27 = por %p25, %p26
    %p28 = scmp.ne.s32.totalorder %s20, %s23
    %p29 = scmp.eq.s32.totalorder %s10, 0
    %p30 = por %p28, %p29
    %p31 = scmp.ne.s32.totalorder %s20, %s23
    %p32 = scmp.eq.s32.totalorder %s15, 1
    %p33 = por %p31, %p32
    %p34 = scmp.ne.s32.totalorder %s23, %s24
    %p35 = scmp.eq.s32.totalorder %s15, 0
    %p36 = por %p34, %p35
    %p37 = scmp.ne.s32.totalorder %s23, %s24
    %p38 = scmp.eq.s32.totalorder %s16, 1
    %p39 = por %p37, %p38
    %p41 = scmp.ne.s32.totalorder %s24, %s40
    %p42 = scmp.eq.s32.totalorder %s16, 0
    %p43 = por %p41, %p42
    %s45 = sadd.s32 %s44, 1
    %p48 = scmp.eq.s32.totalorder %s10, 1
    %p49 = scmp.ne.s32.totalorder %s44, %s46
    %p50 = scmp.eq.s32.totalorder %s10, 0
    %p51 = por %p49, %p50
    %p52 = scmp.ne.s32.totalorder %s44, %s46
    %p53 = scmp.eq.s32.totalorder %s15, 1
    %p54 = por %p52, %p53
    %p55 = scmp.ne.s32.totalorder %s46, %s47
    %p56 = scmp.eq.s32.totalorder %s15, 0
    %p57 = por %p55, %p56
    %p58 = scmp.ne.s32.totalorder %s46, %s47
    %p59 = scmp.eq.s32.totalorder %s16, 1
    %p60 = por %p58, %p59
    %p62 = scmp.ne.s32.totalorder %s47, %s61
    %p63 = scmp.eq.s32.totalorder %s16, 0
    %p64 = por %p62, %p63
    %s66 = sadd.s32 %s65, 1
    %p69 = scmp.eq.s32.totalorder %s10, 1
    %p70 = scmp.ne.s32.totalorder %s65, %s67
    %p71 = scmp.eq.s32.totalorder %s10, 0
    %p72 = por %p70, %p71
    %p73 = scmp.ne.s32.totalorder %s65, %s67
    %p74 = scmp.eq.s32.totalorder %s15, 1
    %p75 = por %p73, %p74
    %p76 = scmp.ne.s32.totalorder %s67, %s68
    %p77 = scmp.eq.s32.totalorder %s15, 0
    %p78 = por %p76, %p77
    %p79 = scmp.ne.s32.totalorder %s67, %s68
    %p80 = scmp.eq.s32.totalorder %s16, 1
    %p81 = por %p79, %p80
    %p83 = scmp.ne.s32.totalorder %s68, %s82
    %p84 = scmp.eq.s32.totalorder %s16, 0
    %p85 = por %p83, %p84
    %s87 = sadd.s32 %s86, 1
    %p90 = scmp.eq.s32.totalorder %s10, 1
    %p91 = scmp.ne.s32.totalorder %s86, %s88
    %p92 = scmp.eq.s32.totalorder %s10, 0
    %p93 = por %p91, %p92
    %p94 = scmp.ne.s32.totalorder %s86, %s88
    %p95 = scmp.eq.s32.totalorder %s15, 1
    %p96 = por %p94, %p95
    %p97 = scmp.ne.s32.totalorder %s88, %s89
    %p98 = scmp.eq.s32.totalorder %s15, 0
    %p99 = por %p97, %p98
    %p100 = scmp.ne.s32.totalorder %s88, %s89
    %p101 = scmp.eq.s32.totalorder %s16, 1
    %p102 = por %p100, %p101
    %p104 = scmp.ne.s32.totalorder %s89, %s103
    %p105 = scmp.eq.s32.totalorder %s16, 0
    %p106 = por %p104, %p105
    %s107 = ssub.s32 %s10, %s17
    %p108 = scmp.eq.s32.totalorder %s107, 0
    %s110 = sadd.s32 %s109, 1
    %s111 = scalar_select %p108, %s109, %s110
    %p114 = pneg %p108
    %p115 = scmp.eq.s32.totalorder %s10, 1
    %p116 = por %p114, %p115
    %p117 = scmp.ne.s32.totalorder %s109, %s112
    %p118 = scmp.eq.s32.totalorder %s10, 0
    %p119 = por %p117, %p118
    %p120 = scmp.ne.s32.totalorder %s109, %s112
    %p121 = scmp.eq.s32.totalorder %s15, 1
    %p122 = por %p120, %p121
    %p123 = scmp.ne.s32.totalorder %s112, %s113
    %p124 = scmp.eq.s32.totalorder %s15, 0
    %p125 = por %p123, %p124
    %p126 = scmp.ne.s32.totalorder %s112, %s113
    %p127 = scmp.eq.s32.totalorder %s16, 1
    %p128 = por %p126, %p127
    %p130 = scmp.ne.s32.totalorder %s113, %s129
    %p131 = scmp.eq.s32.totalorder %s16, 0
    %p132 = por %p130, %p131
    %p133 = scmp.le.s32.totalorder 1, %s10
    %p134 = scmp.lt.s32.totalorder %s10, 3
    %p135 = pnand %p133, %p134
    %p136 = pneg %p135
    // Predicated region
    $region9: #{residual_block.5} parent=5 // pred_check
      _
    $region10: #{residual_block.5} parent=5 // pred_check_branch
      %138 = sbr.rel (%p135) target = $region12
    $region11: #{residual_block.5} parent=5 // pred_region
      %s139 = ssub.s32 %s10, 1
      // Predicated region
      $region13: #{residual_block.5} parent=11 // pred_check
        %p140 = pneg %p57
      $region14: #{residual_block.5} parent=11 // pred_check_branch
        %142 = sbr.rel (%p140) target = $region16
      $region15: #{residual_block.5} parent=11 // pred_region
        _
      $region16: #{residual_block.5} parent=11 // pred_fallthru
        _
      // Predicated region
      $region17: #{residual_block.5} parent=11 // pred_check
        %p143 = pneg %p78
      $region18: #{residual_block.5} parent=11 // pred_check_branch
        %145 = sbr.rel (%p143) target = $region20
      $region19: #{residual_block.5} parent=11 // pred_region
        _
      $region20: #{residual_block.5} parent=11 // pred_fallthru
        _
      // Predicated region
      $region21: #{residual_block.5} parent=11 // pred_check
        %p146 = pneg %p99
      $region22: #{residual_block.5} parent=11 // pred_check_branch
        %148 = sbr.rel (%p146) target = $region24
      $region23: #{residual_block.5} parent=11 // pred_region
        _
      $region24: #{residual_block.5} parent=11 // pred_fallthru
        _
    $region12: #{residual_block.5} parent=5 // pred_fallthru
      _
    %p149 = scmp.lt.s32.totalorder %s10, 2
    // Predicated region
    $region25: #{residual_block.5} parent=5 // pred_check
      %p150 = pneg %p149
    $region26: #{residual_block.5} parent=5 // pred_check_branch
      %152 = sbr.rel (%p150) target = $region28
    $region27: #{residual_block.5} parent=5 // pred_region
      // Predicated region
      $region29: #{residual_block.5} parent=27 // pred_check
        %p153 = pneg %p30
      $region30: #{residual_block.5} parent=27 // pred_check_branch
        %155 = sbr.rel (%p153) target = $region32
      $region31: #{residual_block.5} parent=27 // pred_region
        %p156 = scmp.lt.s32.totalorder %s10, 1
        %s157 = scalar_select %p156, %s10, 1
        %s158 = smul.addr %s157, 2
        %s159 = smul.addr %s158, 8
        %s160 = scalar_lea.vmem %s0, %s159
      $region32: #{residual_block.5} parent=27 // pred_fallthru
        _
    $region28: #{residual_block.5} parent=5 // pred_fallthru
      _
    %p161 = scmp.le.s32.totalorder 1, %s10
    %p162 = scmp.lt.s32.totalorder %s10, 3
    %p163 = pnand %p161, %p162
    %p164 = pneg %p163
    // Predicated region
    $region33: #{residual_block.5} parent=5 // pred_check
      _
    $region34: #{residual_block.5} parent=5 // pred_check_branch
      %166 = sbr.rel (%p163) target = $region36
    $region35: #{residual_block.5} parent=5 // pred_region
      %s167 = ssub.s32 %s10, 1
      %p168 = scmp.lt.s32.totalorder %s15, 1
      %s169 = scalar_select %p168, %s15, 1
      %s170 = smul.addr %s169, 2
      %s171 = smul.addr %s170, 8
      %s172 = scalar_lea.vmem %s0, %s171
      %p173 = pneg %p36
      %p174 = pneg %p33
      %p175 = pneg %p57
      %p176 = pneg %p54
      %p177 = pneg %p78
      %p178 = pneg %p75
      %p179 = pneg %p99
      %p180 = pneg %p96
      %p181 = pneg %p125
      %p182 = pneg %p122
      %p183 = scmp.lt.s32.totalorder %s15, 1
      %s184 = scalar_select %p183, %s15, 1
      %s185 = smul.addr %s184, 2
      %s186 = smul.addr %s185, 8
      %s187 = scalar_lea.vmem %s4, %s186
      %p188 = scmp.lt.s32.totalorder %s15, 1
      %s189 = scalar_select %p188, %s15, 1
      %s190 = smul.addr %s189, 2
      %s191 = smul.addr %s190, 8
      %s192 = scalar_lea.vmem %s0, %s191
      %p193 = scmp.lt.s32.totalorder %s15, 1
      %s194 = scalar_select %p193, %s15, 1
      %s195 = smul.addr %s194, 2
      %s196 = smul.addr %s195, 8
      %s197 = scalar_lea.vmem %s4, %s196
      %v198 = vld [vmem:[%s192] sm:$0xff]
      %v199 = vld [vmem:[%s192 + $0x8] sm:$0xff]
      %v200 = vld [vmem:[%s2] sm:$0xff]
      %202 = vset.pattern.permute.xlu0 0
      %203 = vperm.xlu0 %202, %v200
      %v204 = vpop.permute.xlu0 %203
      %v206 = vmul.f32 %v198, %v204
      %v207 = vmul.f32 %v199, %v204
      %v208 = vld [vmem:[%s3] sm:$0xff]
      %210 = vset.pattern.permute.xlu0 0
      %211 = vperm.xlu0 %210, %v208
      %v212 = vpop.permute.xlu0 %211
      %v214 = vadd.f32 %v206, %v212
      %v215 = vadd.f32 %v207, %v212
      %v216 = vmax.f32 %v214, 0.0
      %v217 = vmax.f32 %v215, 0.0
      %v218 = vld [vmem:[%s1] sm:$0xff]
      %vm219 = vcmask 64512
      %v221 = vsel %vm219, %v218, 0
      %223 = vmatprep.subr.mxu0 %v217
      %224 = vmatpush1.msra.mxu0 %v216
      %225 = vmatprep.subr.mxu0 0.0
      %226 = vmatpush1.msra.mxu0 0.0
      %227 = vmatprep.subr.mxu0 0.0
      %228 = vmatpush1.msra.mxu0 0.0
      %229 = vmatprep.subr.mxu0 0.0
      %230 = vmatpush1.msra.mxu0 0.0
      %231 = vmatprep.subr.mxu0 0.0
      %232 = vmatpush1.msra.mxu0 0.0
      %233 = vmatprep.subr.mxu0 0.0
      %234 = vmatpush1.msra.mxu0 0.0
      %235 = vmatprep.subr.mxu0 0.0
      %236 = vmatpush1.msra.mxu0 0.0
      %237 = vmatprep.subr.mxu0 0.0
      %238 = vmatpush1.msra.mxu0 0.0
      %239 = vmatprep.subr.mxu0 0.0
      %240 = vmatpush1.msra.mxu0 0.0
      %241 = vmatprep.subr.mxu0 0.0
      %242 = vmatpush1.msra.mxu0 0.0
      %243 = vmatprep.subr.mxu0 0.0
      %244 = vmatpush1.msra.mxu0 0.0
      %245 = vmatprep.subr.mxu0 0.0
      %246 = vmatpush1.msra.mxu0 0.0
      %247 = vmatprep.subr.mxu0 0.0
      %248 = vmatpush1.msra.mxu0 0.0
      %249 = vmatprep.subr.mxu0 0.0
      %250 = vmatpush1.msra.mxu0 0.0
      %251 = vmatprep.subr.mxu0 0.0
      %252 = vmatpush1.msra.mxu0 0.0
      %253 = vmatprep.subr.mxu0 0.0
      %254 = vmatpush1.msra.mxu0 0.0
      %255 = vmatprep.subr.mxu0 0.0
      %256 = vmatpush1.msra.mxu0 0.0
      %257 = vmatprep.subr.mxu0 0.0
      %258 = vmatpush1.msra.mxu0 0.0
      %259 = vmatprep.subr.mxu0 0.0
      %260 = vmatpush1.msra.mxu0 0.0
      %261 = vmatprep.subr.mxu0 0.0
      %262 = vmatpush1.msra.mxu0 0.0
      %263 = vmatprep.subr.mxu0 0.0
      %264 = vmatpush1.msra.mxu0 0.0
      %265 = vmatprep.subr.mxu0 0.0
      %266 = vmatpush1.msra.mxu0 0.0
      %267 = vmatprep.subr.mxu0 0.0
      %268 = vmatpush1.msra.mxu0 0.0
      %269 = vmatprep.subr.mxu0 0.0
      %270 = vmatpush1.msra.mxu0 0.0
      %271 = vmatprep.subr.mxu0 0.0
      %272 = vmatpush1.msra.mxu0 0.0
      %273 = vmatprep.subr.mxu0 0.0
      %274 = vmatpush1.msra.mxu0 0.0
      %275 = vmatprep.subr.mxu0 0.0
      %276 = vmatpush1.msra.mxu0 0.0
      %277 = vmatprep.subr.mxu0 0.0
      %278 = vmatpush1.msra.mxu0 0.0
      %279 = vmatprep.subr.mxu0 0.0
      %280 = vmatpush1.msra.mxu0 0.0
      %281 = vmatprep.subr.mxu0 0.0
      %282 = vmatpush1.msra.mxu0 0.0
      %283 = vmatprep.subr.mxu0 0.0
      %284 = vmatpush1.msra.mxu0 0.0
      %285 = vmatprep.subr.mxu0 0.0
      %286 = vmatpush1.msra.mxu0 0.0
      %287 = vmatprep.mubr.f32.mxu0 0.0
      %288 = vmatmul.mubr.f32.gmra.mrb[0].mxu0 %v221
      %v289 = vpop.f32.mrb[0].mxu0
      %v290 = vadd.f32 0.0, %v289
      %v291 = vpop.f32.mrb[0].mxu0
      %v292 = vadd.f32 0.0, %v291
      %293 = vdwg.mxu0
      %294 = vst [vmem:[%s197] sm:$0xff] %v290
      %295 = vst [vmem:[%s197 + $0x8] sm:$0xff] %v292
      %p296 = scmp.lt.s32.totalorder %s15, 1
      %s297 = scalar_select %p296, %s15, 1
      %s298 = smul.addr %s297, 2
      %s299 = smul.addr %s298, 8
      %s300 = scalar_lea.vmem %s4, %s299
      // Predicated region
      $region37: #{residual_block.5} parent=35 // pred_check
        %p301 = pneg %p122
      $region38: #{residual_block.5} parent=35 // pred_check_branch
        %303 = sbr.rel (%p301) target = $region40
      $region39: #{residual_block.5} parent=35 // pred_region
        _
      $region40: #{residual_block.5} parent=35 // pred_fallthru
        _
    $region36: #{residual_block.5} parent=5 // pred_fallthru
      _
    %p304 = scmp.le.s32.totalorder 2, %s10
    // Predicated region
    $region41: #{residual_block.5} parent=5 // pred_check
      %p305 = pneg %p304
    $region42: #{residual_block.5} parent=5 // pred_check_branch
      %307 = sbr.rel (%p305) target = $region44
    $region43: #{residual_block.5} parent=5 // pred_region
      %s308 = ssub.s32 %s10, 2
      // Predicated region
      $region45: #{residual_block.5} parent=43 // pred_check
        %p309 = pneg %p128
      $region46: #{residual_block.5} parent=43 // pred_check_branch
        %311 = sbr.rel (%p309) target = $region48
      $region47: #{residual_block.5} parent=43 // pred_region
        %p312 = scmp.lt.s32.totalorder %s16, 1
        %s313 = scalar_select %p312, %s16, 1
        %s314 = smul.addr %s313, 2
        %s315 = smul.addr %s314, 8
        %s316 = scalar_lea.vmem %s4, %s315
      $region48: #{residual_block.5} parent=43 // pred_fallthru
        _
    $region44: #{residual_block.5} parent=5 // pred_fallthru
      _
  $region6: #{residual_block.5} parent=0 // loop_footer
    %s14 = sadd.s32 1, %s10
  $region7: #{residual_block.5} parent=0 // loop_footer_branch
    %9 = sbr.rel target = $region3
  $region8: #{residual_block.5} parent=0 // loop_exit
    _

// kernel: residual_block.3
$region0: #{residual_block.3}
  #allocation0 [shape = 'u32[]', space=smem, size = 0x4, offset = 0x4, fixed_abs, tag = 'smem constant byte address 0x4 - core index']
  #allocation1 [shape = 'u32[144,128]{1,0:T(1,128)}', space=vmem, size = 0x12000, scoped, tag = 'internal scratch']
  %s0 = inlined_call_operand.vmem [shape: f32[2,8,256], index: 0, kind: input, shape index: {}]
  %s1 = inlined_call_operand.vmem [shape: f32[8,8], index: 1, kind: input, shape index: {}]
  %s2 = inlined_call_operand.vmem [shape: f32[8,1], index: 2, kind: input, shape index: {}]
  %s3 = inlined_call_operand.vmem [shape: f32[8,1], index: 3, kind: input, shape index: {}]
  %s4 = inlined_call_operand.vmem [shape: f32[2,8,256], index: 4, kind: output, shape index: {0}]
  %s5 = inlined_call_operand.vmem [shape: f32[2,8,128], index: 5, kind: output, shape index: {1}]
  %6 = xla_tuple %s4, %s5
  %s7 = sld [smem:[#allocation0]]
  $region57: #{residual_block.3} parent=0
    _
  %s9 = ssub.s32 1, %s7
  %s10 = scalar_select 0, %s9, %s7
  loop: start=0, step=1, limit=4
  $region2: #{residual_block.3} parent=0 // loop_pre_header
    _
  $region3: #{residual_block.3} parent=0 // loop_header
    %s12 = sphi 0, %s16
    %p13 = scmp.ge.s32.totalorder %s12, 4
    %s22 = sphi 0, %s24
    %s25 = sphi 0, %s22
    %s26 = sphi 0, %s25
    %s42 = sphi 0, %s26
    %s46 = sphi 0, %s46
    %s48 = sphi 0, %s46
    %s49 = sphi 0, %s48
    %s63 = sphi 0, %s49
    %s67 = sphi 0, %s67
    %s69 = sphi 0, %s67
    %s70 = sphi 0, %s69
    %s84 = sphi 0, %s70
    %s88 = sphi 0, %s88
    %s90 = sphi 0, %s88
    %s91 = sphi 0, %s90
    %s105 = sphi 0, %s91
    %s111 = sphi 0, %s113
    %s114 = sphi 0, %s111
    %s115 = sphi 0, %s114
    %s131 = sphi 0, %s115
    %s137 = sphi 0, %s139
    %s140 = sphi 0, %s137
    %s141 = sphi 0, %s140
    %s157 = sphi 0, %s141
  $region4: #{residual_block.3} parent=0 // loop_header_branch
    %15 = sbr.rel (%p13) target = $region8
  $region5: #{residual_block.3} parent=0 // loop_body
    %s17 = ssub.s32 %s12, 1
    %s18 = ssub.s32 %s12, 2
    %s19 = sadd.s32 %s12, 1
    %s20 = ssub.s32 %s12, %s19
    %p21 = scmp.eq.s32.totalorder %s20, 0
    %s23 = sadd.s32 %s22, 1
    %s24 = scalar_select %p21, %s22, %s23
    %p27 = pneg %p21
    %p28 = scmp.eq.s32.totalorder %s12, 1
    %p29 = por %p27, %p28
    %p30 = scmp.ne.s32.totalorder %s22, %s25
    %p31 = scmp.eq.s32.totalorder %s12, 0
    %p32 = por %p30, %p31
    %p33 = scmp.ne.s32.totalorder %s22, %s25
    %p34 = scmp.eq.s32.totalorder %s17, 1
    %p35 = por %p33, %p34
    %p36 = scmp.ne.s32.totalorder %s25, %s26
    %p37 = scmp.eq.s32.totalorder %s17, 0
    %p38 = por %p36, %p37
    %p39 = scmp.ne.s32.totalorder %s25, %s26
    %p40 = scmp.eq.s32.totalorder %s18, 1
    %p41 = por %p39, %p40
    %p43 = scmp.ne.s32.totalorder %s26, %s42
    %p44 = scmp.eq.s32.totalorder %s18, 0
    %p45 = por %p43, %p44
    %s47 = sadd.s32 %s46, 1
    %p50 = scmp.eq.s32.totalorder %s12, 1
    %p51 = scmp.ne.s32.totalorder %s46, %s48
    %p52 = scmp.eq.s32.totalorder %s12, 0
    %p53 = por %p51, %p52
    %p54 = scmp.ne.s32.totalorder %s46, %s48
    %p55 = scmp.eq.s32.totalorder %s17, 1
    %p56 = por %p54, %p55
    %p57 = scmp.ne.s32.totalorder %s48, %s49
    %p58 = scmp.eq.s32.totalorder %s17, 0
    %p59 = por %p57, %p58
    %p60 = scmp.ne.s32.totalorder %s48, %s49
    %p61 = scmp.eq.s32.totalorder %s18, 1
    %p62 = por %p60, %p61
    %p64 = scmp.ne.s32.totalorder %s49, %s63
    %p65 = scmp.eq.s32.totalorder %s18, 0
    %p66 = por %p64, %p65
    %s68 = sadd.s32 %s67, 1
    %p71 = scmp.eq.s32.totalorder %s12, 1
    %p72 = scmp.ne.s32.totalorder %s67, %s69
    %p73 = scmp.eq.s32.totalorder %s12, 0
    %p74 = por %p72, %p73
    %p75 = scmp.ne.s32.totalorder %s67, %s69
    %p76 = scmp.eq.s32.totalorder %s17, 1
    %p77 = por %p75, %p76
    %p78 = scmp.ne.s32.totalorder %s69, %s70
    %p79 = scmp.eq.s32.totalorder %s17, 0
    %p80 = por %p78, %p79
    %p81 = scmp.ne.s32.totalorder %s69, %s70
    %p82 = scmp.eq.s32.totalorder %s18, 1
    %p83 = por %p81, %p82
    %p85 = scmp.ne.s32.totalorder %s70, %s84
    %p86 = scmp.eq.s32.totalorder %s18, 0
    %p87 = por %p85, %p86
    %s89 = sadd.s32 %s88, 1
    %p92 = scmp.eq.s32.totalorder %s12, 1
    %p93 = scmp.ne.s32.totalorder %s88, %s90
    %p94 = scmp.eq.s32.totalorder %s12, 0
    %p95 = por %p93, %p94
    %p96 = scmp.ne.s32.totalorder %s88, %s90
    %p97 = scmp.eq.s32.totalorder %s17, 1
    %p98 = por %p96, %p97
    %p99 = scmp.ne.s32.totalorder %s90, %s91
    %p100 = scmp.eq.s32.totalorder %s17, 0
    %p101 = por %p99, %p100
    %p102 = scmp.ne.s32.totalorder %s90, %s91
    %p103 = scmp.eq.s32.totalorder %s18, 1
    %p104 = por %p102, %p103
    %p106 = scmp.ne.s32.totalorder %s91, %s105
    %p107 = scmp.eq.s32.totalorder %s18, 0
    %p108 = por %p106, %p107
    %s109 = ssub.s32 %s12, %s19
    %p110 = scmp.eq.s32.totalorder %s109, 0
    %s112 = sadd.s32 %s111, 1
    %s113 = scalar_select %p110, %s111, %s112
    %p116 = pneg %p110
    %p117 = scmp.eq.s32.totalorder %s12, 1
    %p118 = por %p116, %p117
    %p119 = scmp.ne.s32.totalorder %s111, %s114
    %p120 = scmp.eq.s32.totalorder %s12, 0
    %p121 = por %p119, %p120
    %p122 = scmp.ne.s32.totalorder %s111, %s114
    %p123 = scmp.eq.s32.totalorder %s17, 1
    %p124 = por %p122, %p123
    %p125 = scmp.ne.s32.totalorder %s114, %s115
    %p126 = scmp.eq.s32.totalorder %s17, 0
    %p127 = por %p125, %p126
    %p128 = scmp.ne.s32.totalorder %s114, %s115
    %p129 = scmp.eq.s32.totalorder %s18, 1
    %p130 = por %p128, %p129
    %p132 = scmp.ne.s32.totalorder %s115, %s131
    %p133 = scmp.eq.s32.totalorder %s18, 0
    %p134 = por %p132, %p133
    %s135 = ssub.s32 %s12, %s19
    %p136 = scmp.eq.s32.totalorder %s135, 0
    %s138 = sadd.s32 %s137, 1
    %s139 = scalar_select %p136, %s137, %s138
    %p142 = pneg %p136
    %p143 = scmp.eq.s32.totalorder %s12, 1
    %p144 = por %p142, %p143
    %p145 = scmp.ne.s32.totalorder %s137, %s140
    %p146 = scmp.eq.s32.totalorder %s12, 0
    %p147 = por %p145, %p146
    %p148 = scmp.ne.s32.totalorder %s137, %s140
    %p149 = scmp.eq.s32.totalorder %s17, 1
    %p150 = por %p148, %p149
    %p151 = scmp.ne.s32.totalorder %s140, %s141
    %p152 = scmp.eq.s32.totalorder %s17, 0
    %p153 = por %p151, %p152
    %p154 = scmp.ne.s32.totalorder %s140, %s141
    %p155 = scmp.eq.s32.totalorder %s18, 1
    %p156 = por %p154, %p155
    %p158 = scmp.ne.s32.totalorder %s141, %s157
    %p159 = scmp.eq.s32.totalorder %s18, 0
    %p160 = por %p158, %p159
    %p161 = scmp.le.s32.totalorder 1, %s12
    %p162 = scmp.lt.s32.totalorder %s12, 3
    %p163 = pnand %p161, %p162
    %p164 = pneg %p163
    // Predicated region
    $region9: #{residual_block.3} parent=5 // pred_check
      _
    $region10: #{residual_block.3} parent=5 // pred_check_branch
      %166 = sbr.rel (%p163) target = $region12
    $region11: #{residual_block.3} parent=5 // pred_region
      %s167 = ssub.s32 %s12, 1
      // Predicated region
      $region13: #{residual_block.3} parent=11 // pred_check
        %p168 = pneg %p59
      $region14: #{residual_block.3} parent=11 // pred_check_branch
        %170 = sbr.rel (%p168) target = $region16
      $region15: #{residual_block.3} parent=11 // pred_region
        _
      $region16: #{residual_block.3} parent=11 // pred_fallthru
        _
      // Predicated region
      $region17: #{residual_block.3} parent=11 // pred_check
        %p171 = pneg %p80
      $region18: #{residual_block.3} parent=11 // pred_check_branch
        %173 = sbr.rel (%p171) target = $region20
      $region19: #{residual_block.3} parent=11 // pred_region
        _
      $region20: #{residual_block.3} parent=11 // pred_fallthru
        _
      // Predicated region
      $region21: #{residual_block.3} parent=11 // pred_check
        %p174 = pneg %p101
      $region22: #{residual_block.3} parent=11 // pred_check_branch
        %176 = sbr.rel (%p174) target = $region24
      $region23: #{residual_block.3} parent=11 // pred_region
        _
      $region24: #{residual_block.3} parent=11 // pred_fallthru
        _
    $region12: #{residual_block.3} parent=5 // pred_fallthru
      _
    %p177 = scmp.lt.s32.totalorder %s12, 2
    // Predicated region
    $region25: #{residual_block.3} parent=5 // pred_check
      %p178 = pneg %p177
    $region26: #{residual_block.3} parent=5 // pred_check_branch
      %180 = sbr.rel (%p178) target = $region28
    $region27: #{residual_block.3} parent=5 // pred_region
      // Predicated region
      $region29: #{residual_block.3} parent=27 // pred_check
        %p181 = pneg %p32
      $region30: #{residual_block.3} parent=27 // pred_check_branch
        %183 = sbr.rel (%p181) target = $region32
      $region31: #{residual_block.3} parent=27 // pred_region
        %p184 = scmp.lt.s32.totalorder %s12, 1
        %s185 = scalar_select %p184, %s12, 1
        %s186 = smul.addr %s185, 2
        %s187 = smul.addr %s186, 8
        %s188 = scalar_lea.vmem %s0, %s187
      $region32: #{residual_block.3} parent=27 // pred_fallthru
        _
    $region28: #{residual_block.3} parent=5 // pred_fallthru
      _
    %p189 = scmp.le.s32.totalorder 1, %s12
    %p190 = scmp.lt.s32.totalorder %s12, 3
    %p191 = pnand %p189, %p190
    %p192 = pneg %p191
    // Predicated region
    $region33: #{residual_block.3} parent=5 // pred_check
      _
    $region34: #{residual_block.3} parent=5 // pred_check_branch
      %194 = sbr.rel (%p191) target = $region36
    $region35: #{residual_block.3} parent=5 // pred_region
      %s195 = ssub.s32 %s12, 1
      %p196 = scmp.lt.s32.totalorder %s17, 1
      %s197 = scalar_select %p196, %s17, 1
      %s198 = smul.addr %s197, 2
      %s199 = smul.addr %s198, 8
      %s200 = scalar_lea.vmem %s0, %s199
      %p201 = pneg %p38
      %p202 = pneg %p35
      %p203 = pneg %p59
      %p204 = pneg %p56
      %p205 = pneg %p80
      %p206 = pneg %p77
      %p207 = pneg %p101
      %p208 = pneg %p98
      %p209 = pneg %p127
      %p210 = pneg %p124
      %p211 = scmp.lt.s32.totalorder %s17, 1
      %s212 = scalar_select %p211, %s17, 1
      %s213 = smul.addr %s212, 2
      %s214 = smul.addr %s213, 8
      %s215 = scalar_lea.vmem %s4, %s214
      %p216 = pneg %p153
      %p217 = pneg %p150
      %p218 = scmp.lt.s32.totalorder %s17, 1
      %s219 = scalar_select %p218, %s17, 1
      %s220 = smul.addr %s219, 8
      %s221 = scalar_lea.vmem %s5, %s220
      %p222 = scmp.lt.s32.totalorder %s17, 1
      %s223 = scalar_select %p222, %s17, 1
      %s224 = smul.addr %s223, 2
      %s225 = smul.addr %s224, 8
      %s226 = scalar_lea.vmem %s0, %s225
      %p227 = scmp.lt.s32.totalorder %s17, 1
      %s228 = scalar_select %p227, %s17, 1
      %s229 = smul.addr %s228, 2
      %s230 = smul.addr %s229, 8
      %s231 = scalar_lea.vmem %s4, %s230
      %p232 = scmp.lt.s32.totalorder %s17, 1
      %s233 = scalar_select %p232, %s17, 1
      %s234 = smul.addr %s233, 8
      %s235 = scalar_lea.vmem %s5, %s234
      %v236 = vld [vmem:[%s226] sm:$0xff]
      %v237 = vld [vmem:[%s226 + $0x8] sm:$0xff]
      %v238 = vld [vmem:[%s2] sm:$0xff]
      %240 = vset.pattern.permute.xlu0 0
      %241 = vperm.xlu0 %240, %v238
      %v242 = vpop.permute.xlu0 %241
      %v244 = vmul.f32 %v236, %v242
      %v245 = vmul.f32 %v237, %v242
      %v246 = vld [vmem:[%s3] sm:$0xff]
      %248 = vset.pattern.permute.xlu0 0
      %249 = vperm.xlu0 %248, %v246
      %v250 = vpop.permute.xlu0 %249
      %v252 = vadd.f32 %v244, %v250
      %v253 = vadd.f32 %v245, %v250
      %v254 = vmax.f32 %v252, 0.0
      %v255 = vmax.f32 %v253, 0.0
      %v256 = vld [vmem:[%s1] sm:$0xff]
      %vm257 = vcmask 64512
      %v259 = vsel %vm257, %v256, 0
      %261 = vmatprep.subr.mxu0 %v255
      %262 = vmatpush1.msra.mxu0 %v254
      %263 = vmatprep.subr.mxu0 0.0
      %264 = vmatpush1.msra.mxu0 0.0
      %265 = vmatprep.subr.mxu0 0.0
      %266 = vmatpush1.msra.mxu0 0.0
      %267 = vmatprep.subr.mxu0 0.0
      %268 = vmatpush1.msra.mxu0 0.0
      %269 = vmatprep.subr.mxu0 0.0
      %270 = vmatpush1.msra.mxu0 0.0
      %271 = vmatprep.subr.mxu0 0.0
      %272 = vmatpush1.msra.mxu0 0.0
      %273 = vmatprep.subr.mxu0 0.0
      %274 = vmatpush1.msra.mxu0 0.0
      %275 = vmatprep.subr.mxu0 0.0
      %276 = vmatpush1.msra.mxu0 0.0
      %277 = vmatprep.subr.mxu0 0.0
      %278 = vmatpush1.msra.mxu0 0.0
      %279 = vmatprep.subr.mxu0 0.0
      %280 = vmatpush1.msra.mxu0 0.0
      %281 = vmatprep.subr.mxu0 0.0
      %282 = vmatpush1.msra.mxu0 0.0
      %283 = vmatprep.subr.mxu0 0.0
      %284 = vmatpush1.msra.mxu0 0.0
      %285 = vmatprep.subr.mxu0 0.0
      %286 = vmatpush1.msra.mxu0 0.0
      %287 = vmatprep.subr.mxu0 0.0
      %288 = vmatpush1.msra.mxu0 0.0
      %289 = vmatprep.subr.mxu0 0.0
      %290 = vmatpush1.msra.mxu0 0.0
      %291 = vmatprep.subr.mxu0 0.0
      %292 = vmatpush1.msra.mxu0 0.0
      %293 = vmatprep.subr.mxu0 0.0
      %294 = vmatpush1.msra.mxu0 0.0
      %295 = vmatprep.subr.mxu0 0.0
      %296 = vmatpush1.msra.mxu0 0.0
      %297 = vmatprep.subr.mxu0 0.0
      %298 = vmatpush1.msra.mxu0 0.0
      %299 = vmatprep.subr.mxu0 0.0
      %300 = vmatpush1.msra.mxu0 0.0
      %301 = vmatprep.subr.mxu0 0.0
      %302 = vmatpush1.msra.mxu0 0.0
      %303 = vmatprep.subr.mxu0 0.0
      %304 = vmatpush1.msra.mxu0 0.0
      %305 = vmatprep.subr.mxu0 0.0
      %306 = vmatpush1.msra.mxu0 0.0
      %307 = vmatprep.subr.mxu0 0.0
      %308 = vmatpush1.msra.mxu0 0.0
      %309 = vmatprep.subr.mxu0 0.0
      %310 = vmatpush1.msra.mxu0 0.0
      %311 = vmatprep.subr.mxu0 0.0
      %312 = vmatpush1.msra.mxu0 0.0
      %313 = vmatprep.subr.mxu0 0.0
      %314 = vmatpush1.msra.mxu0 0.0
      %315 = vmatprep.subr.mxu0 0.0
      %316 = vmatpush1.msra.mxu0 0.0
      %317 = vmatprep.subr.mxu0 0.0
      %318 = vmatpush1.msra.mxu0 0.0
      %319 = vmatprep.subr.mxu0 0.0
      %320 = vmatpush1.msra.mxu0 0.0
      %321 = vmatprep.subr.mxu0 0.0
      %322 = vmatpush1.msra.mxu0 0.0
      %323 = vmatprep.subr.mxu0 0.0
      %324 = vmatpush1.msra.mxu0 0.0
      %325 = vmatprep.mubr.f32.mxu0 0.0
      %326 = vmatmul.mubr.f32.gmra.mrb[0].mxu0 %v259
      %v327 = vpop.f32.mrb[0].mxu0
      %v328 = vadd.f32 0.0, %v327
      %v329 = vpop.f32.mrb[0].mxu0
      %v330 = vadd.f32 0.0, %v329
      %331 = vdwg.mxu0
      %332 = vst [vmem:[%s231] sm:$0xff] %v328
      %333 = vst [vmem:[%s231 + $0x8] sm:$0xff] %v330
      %v334 = vadd.f32 %v328, %v330
      %335 = vadd.xlane.f32.xlu0 %v334
      %v336 = vpop.xlane.xlu0 %335
      %v337 = vmul.f32 %v328, %v328
      %v338 = vmul.f32 %v330, %v330
      %v339 = vadd.f32 %v337, %v338
      %340 = vadd.xlane.f32.xlu0 %v339
      %v341 = vpop.xlane.xlu0 %340
      %vm342 = vcmask 7168
      %v343 = vsel %vm342, %v336, %v341
      %vm344 = vcmask 15360
      %v345 = vsel %vm344, %v343, 0.0
      %346 = vst [vmem:[%s235] sm:$0xff] %v345
      %p347 = scmp.lt.s32.totalorder %s17, 1
      %s348 = scalar_select %p347, %s17, 1
      %s349 = smul.addr %s348, 2
      %s350 = smul.addr %s349, 8
      %s351 = scalar_lea.vmem %s4, %s350
      %p352 = scmp.lt.s32.totalorder %s17, 1
      %s353 = scalar_select %p352, %s17, 1
      %s354 = smul.addr %s353, 8
      %s355 = scalar_lea.vmem %s5, %s354
      // Predicated region
      $region37: #{residual_block.3} parent=35 // pred_check
        %p356 = pneg %p124
      $region38: #{residual_block.3} parent=35 // pred_check_branch
        %358 = sbr.rel (%p356) target = $region40
      $region39: #{residual_block.3} parent=35 // pred_region
        _
      $region40: #{residual_block.3} parent=35 // pred_fallthru
        _
      // Predicated region
      $region41: #{residual_block.3} parent=35 // pred_check
        %p359 = pneg %p150
      $region42: #{residual_block.3} parent=35 // pred_check_branch
        %361 = sbr.rel (%p359) target = $region44
      $region43: #{residual_block.3} parent=35 // pred_region
        _
      $region44: #{residual_block.3} parent=35 // pred_fallthru
        _
    $region36: #{residual_block.3} parent=5 // pred_fallthru
      _
    %p362 = scmp.le.s32.totalorder 2, %s12
    // Predicated region
    $region45: #{residual_block.3} parent=5 // pred_check
      %p363 = pneg %p362
    $region46: #{residual_block.3} parent=5 // pred_check_branch
      %365 = sbr.rel (%p363) target = $region48
    $region47: #{residual_block.3} parent=5 // pred_region
      %s366 = ssub.s32 %s12, 2
      // Predicated region
      $region49: #{residual_block.3} parent=47 // pred_check
        %p367 = pneg %p130
      $region50: #{residual_block.3} parent=47 // pred_check_branch
        %369 = sbr.rel (%p367) target = $region52
      $region51: #{residual_block.3} parent=47 // pred_region
        %p370 = scmp.lt.s32.totalorder %s18, 1
        %s371 = scalar_select %p370, %s18, 1
        %s372 = smul.addr %s371, 2
        %s373 = smul.addr %s372, 8
        %s374 = scalar_lea.vmem %s4, %s373
      $region52: #{residual_block.3} parent=47 // pred_fallthru
        _
      // Predicated region
      $region53: #{residual_block.3} parent=47 // pred_check
        %p375 = pneg %p156
      $region54: #{residual_block.3} parent=47 // pred_check_branch
        %377 = sbr.rel (%p375) target = $region56
      $region55: #{residual_block.3} parent=47 // pred_region
        %p378 = scmp.lt.s32.totalorder %s18, 1
        %s379 = scalar_select %p378, %s18, 1
        %s380 = smul.addr %s379, 8
        %s381 = scalar_lea.vmem %s5, %s380
      $region56: #{residual_block.3} parent=47 // pred_fallthru
        _
    $region48: #{residual_block.3} parent=5 // pred_fallthru
      _
  $region6: #{residual_block.3} parent=0 // loop_footer
    %s16 = sadd.s32 1, %s12
  $region7: #{residual_block.3} parent=0 // loop_footer_branch
    %11 = sbr.rel target = $region3
  $region8: #{residual_block.3} parent=0 // loop_exit
    _

// kernel: residual_block.4
$region0: #{residual_block.4}
  #allocation0 [shape = 'u32[]', space=smem, size = 0x4, offset = 0x4, fixed_abs, tag = 'smem constant byte address 0x4 - core index']
  #allocation1 [shape = 'u32[144,128]{1,0:T(1,128)}', space=vmem, size = 0x12000, scoped, tag = 'internal scratch']
  %s0 = inlined_call_operand.vmem [shape: f32[2,8,256], index: 0, kind: input, shape index: {}]
  %s1 = inlined_call_operand.vmem [shape: f32[8,72], index: 1, kind: input, shape index: {}]
  %s2 = inlined_call_operand.vmem [shape: f32[8,1], index: 2, kind: input, shape index: {}]
  %s3 = inlined_call_operand.vmem [shape: f32[8,1], index: 3, kind: input, shape index: {}]
  %s4 = inlined_call_operand.vmem [shape: f32[9,1,256], index: 4, kind: input, shape index: {}]
  %s5 = inlined_call_operand.vmem [shape: f32[2,8,256], index: 5, kind: output, shape index: {0}]
  %s6 = inlined_call_operand.vmem [shape: f32[2,8,128], index: 6, kind: output, shape index: {1}]
  %7 = xla_tuple %s5, %s6
  %s8 = sld [smem:[#allocation0]]
  $region61: #{residual_block.4} parent=0
    _
  %s10 = ssub.s32 1, %s8
  %s11 = scalar_select 0, %s10, %s8
  loop: start=0, step=1, limit=4
  $region2: #{residual_block.4} parent=0 // loop_pre_header
    _
  $region3: #{residual_block.4} parent=0 // loop_header
    %s13 = sphi 0, %s17
    %p14 = scmp.ge.s32.totalorder %s13, 4
    %s23 = sphi 0, %s25
    %s26 = sphi 0, %s23
    %s27 = sphi 0, %s26
    %s43 = sphi 0, %s27
    %s47 = sphi 0, %s47
    %s49 = sphi 0, %s47
    %s50 = sphi 0, %s49
    %s64 = sphi 0, %s50
    %s68 = sphi 0, %s68
    %s70 = sphi 0, %s68
    %s71 = sphi 0, %s70
    %s85 = sphi 0, %s71
    %s89 = sphi 0, %s89
    %s91 = sphi 0, %s89
    %s92 = sphi 0, %s91
    %s106 = sphi 0, %s92
    %s110 = sphi 0, %s110
    %s112 = sphi 0, %s110
    %s113 = sphi 0, %s112
    %s127 = sphi 0, %s113
    %s133 = sphi 0, %s135
    %s136 = sphi 0, %s133
    %s137 = sphi 0, %s136
    %s153 = sphi 0, %s137
    %s159 = sphi 0, %s161
    %s162 = sphi 0, %s159
    %s163 = sphi 0, %s162
    %s179 = sphi 0, %s163
  $region4: #{residual_block.4} parent=0 // loop_header_branch
    %16 = sbr.rel (%p14) target = $region8
  $region5: #{residual_block.4} parent=0 // loop_body
    %s18 = ssub.s32 %s13, 1
    %s19 = ssub.s32 %s13, 2
    %s20 = sadd.s32 %s13, 1
    %s21 = ssub.s32 %s13, %s20
    %p22 = scmp.eq.s32.totalorder %s21, 0
    %s24 = sadd.s32 %s23, 1
    %s25 = scalar_select %p22, %s23, %s24
    %p28 = pneg %p22
    %p29 = scmp.eq.s32.totalorder %s13, 1
    %p30 = por %p28, %p29
    %p31 = scmp.ne.s32.totalorder %s23, %s26
    %p32 = scmp.eq.s32.totalorder %s13, 0
    %p33 = por %p31, %p32
    %p34 = scmp.ne.s32.totalorder %s23, %s26
    %p35 = scmp.eq.s32.totalorder %s18, 1
    %p36 = por %p34, %p35
    %p37 = scmp.ne.s32.totalorder %s26, %s27
    %p38 = scmp.eq.s32.totalorder %s18, 0
    %p39 = por %p37, %p38
    %p40 = scmp.ne.s32.totalorder %s26, %s27
    %p41 = scmp.eq.s32.totalorder %s19, 1
    %p42 = por %p40, %p41
    %p44 = scmp.ne.s32.totalorder %s27, %s43
    %p45 = scmp.eq.s32.totalorder %s19, 0
    %p46 = por %p44, %p45
    %s48 = sadd.s32 %s47, 1
    %p51 = scmp.eq.s32.totalorder %s13, 1
    %p52 = scmp.ne.s32.totalorder %s47, %s49
    %p53 = scmp.eq.s32.totalorder %s13, 0
    %p54 = por %p52, %p53
    %p55 = scmp.ne.s32.totalorder %s47, %s49
    %p56 = scmp.eq.s32.totalorder %s18, 1
    %p57 = por %p55, %p56
    %p58 = scmp.ne.s32.totalorder %s49, %s50
    %p59 = scmp.eq.s32.totalorder %s18, 0
    %p60 = por %p58, %p59
    %p61 = scmp.ne.s32.totalorder %s49, %s50
    %p62 = scmp.eq.s32.totalorder %s19, 1
    %p63 = por %p61, %p62
    %p65 = scmp.ne.s32.totalorder %s50, %s64
    %p66 = scmp.eq.s32.totalorder %s19, 0
    %p67 = por %p65, %p66
    %s69 = sadd.s32 %s68, 1
    %p72 = scmp.eq.s32.totalorder %s13, 1
    %p73 = scmp.ne.s32.totalorder %s68, %s70
    %p74 = scmp.eq.s32.totalorder %s13, 0
    %p75 = por %p73, %p74
    %p76 = scmp.ne.s32.totalorder %s68, %s70
    %p77 = scmp.eq.s32.totalorder %s18, 1
    %p78 = por %p76, %p77
    %p79 = scmp.ne.s32.totalorder %s70, %s71
    %p80 = scmp.eq.s32.totalorder %s18, 0
    %p81 = por %p79, %p80
    %p82 = scmp.ne.s32.totalorder %s70, %s71
    %p83 = scmp.eq.s32.totalorder %s19, 1
    %p84 = por %p82, %p83
    %p86 = scmp.ne.s32.totalorder %s71, %s85
    %p87 = scmp.eq.s32.totalorder %s19, 0
    %p88 = por %p86, %p87
    %s90 = sadd.s32 %s89, 1
    %p93 = scmp.eq.s32.totalorder %s13, 1
    %p94 = scmp.ne.s32.totalorder %s89, %s91
    %p95 = scmp.eq.s32.totalorder %s13, 0
    %p96 = por %p94, %p95
    %p97 = scmp.ne.s32.totalorder %s89, %s91
    %p98 = scmp.eq.s32.totalorder %s18, 1
    %p99 = por %p97, %p98
    %p100 = scmp.ne.s32.totalorder %s91, %s92
    %p101 = scmp.eq.s32.totalorder %s18, 0
    %p102 = por %p100, %p101
    %p103 = scmp.ne.s32.totalorder %s91, %s92
    %p104 = scmp.eq.s32.totalorder %s19, 1
    %p105 = por %p103, %p104
    %p107 = scmp.ne.s32.totalorder %s92, %s106
    %p108 = scmp.eq.s32.totalorder %s19, 0
    %p109 = por %p107, %p108
    %s111 = sadd.s32 %s110, 1
    %p114 = scmp.eq.s32.totalorder %s13, 1
    %p115 = scmp.ne.s32.totalorder %s110, %s112
    %p116 = scmp.eq.s32.totalorder %s13, 0
    %p117 = por %p115, %p116
    %p118 = scmp.ne.s32.totalorder %s110, %s112
    %p119 = scmp.eq.s32.totalorder %s18, 1
    %p120 = por %p118, %p119
    %p121 = scmp.ne.s32.totalorder %s112, %s113
    %p122 = scmp.eq.s32.totalorder %s18, 0
    %p123 = por %p121, %p122
    %p124 = scmp.ne.s32.totalorder %s112, %s113
    %p125 = scmp.eq.s32.totalorder %s19, 1
    %p126 = por %p124, %p125
    %p128 = scmp.ne.s32.totalorder %s113, %s127
    %p129 = scmp.eq.s32.totalorder %s19, 0
    %p130 = por %p128, %p129
    %s131 = ssub.s32 %s13, %s20
    %p132 = scmp.eq.s32.totalorder %s131, 0
    %s134 = sadd.s32 %s133, 1
    %s135 = scalar_select %p132, %s133, %s134
    %p138 = pneg %p132
    %p139 = scmp.eq.s32.totalorder %s13, 1
    %p140 = por %p138, %p139
    %p141 = scmp.ne.s32.totalorder %s133, %s136
    %p142 = scmp.eq.s32.totalorder %s13, 0
    %p143 = por %p141, %p142
    %p144 = scmp.ne.s32.totalorder %s133, %s136
    %p145 = scmp.eq.s32.totalorder %s18, 1
    %p146 = por %p144, %p145
    %p147 = scmp.ne.s32.totalorder %s136, %s137
    %p148 = scmp.eq.s32.totalorder %s18, 0
    %p149 = por %p147, %p148
    %p150 = scmp.ne.s32.totalorder %s136, %s137
    %p151 = scmp.eq.s32.totalorder %s19, 1
    %p152 = por %p150, %p151
    %p154 = scmp.ne.s32.totalorder %s137, %s153
    %p155 = scmp.eq.s32.totalorder %s19, 0
    %p156 = por %p154, %p155
    %s157 = ssub.s32 %s13, %s20
    %p158 = scmp.eq.s32.totalorder %s157, 0
    %s160 = sadd.s32 %s159, 1
    %s161 = scalar_select %p158, %s159, %s160
    %p164 = pneg %p158
    %p165 = scmp.eq.s32.totalorder %s13, 1
    %p166 = por %p164, %p165
    %p167 = scmp.ne.s32.totalorder %s159, %s162
    %p168 = scmp.eq.s32.totalorder %s13, 0
    %p169 = por %p167, %p168
    %p170 = scmp.ne.s32.totalorder %s159, %s162
    %p171 = scmp.eq.s32.totalorder %s18, 1
    %p172 = por %p170, %p171
    %p173 = scmp.ne.s32.totalorder %s162, %s163
    %p174 = scmp.eq.s32.totalorder %s18, 0
    %p175 = por %p173, %p174
    %p176 = scmp.ne.s32.totalorder %s162, %s163
    %p177 = scmp.eq.s32.totalorder %s19, 1
    %p178 = por %p176, %p177
    %p180 = scmp.ne.s32.totalorder %s163, %s179
    %p181 = scmp.eq.s32.totalorder %s19, 0
    %p182 = por %p180, %p181
    %p183 = scmp.le.s32.totalorder 1, %s13
    %p184 = scmp.lt.s32.totalorder %s13, 3
    %p185 = pnand %p183, %p184
    %p186 = pneg %p185
    // Predicated region
    $region9: #{residual_block.4} parent=5 // pred_check
      _
    $region10: #{residual_block.4} parent=5 // pred_check_branch
      %188 = sbr.rel (%p185) target = $region12
    $region11: #{residual_block.4} parent=5 // pred_region
      %s189 = ssub.s32 %s13, 1
      // Predicated region
      $region13: #{residual_block.4} parent=11 // pred_check
        %p190 = pneg %p60
      $region14: #{residual_block.4} parent=11 // pred_check_branch
        %192 = sbr.rel (%p190) target = $region16
      $region15: #{residual_block.4} parent=11 // pred_region
        _
      $region16: #{residual_block.4} parent=11 // pred_fallthru
        _
      // Predicated region
      $region17: #{residual_block.4} parent=11 // pred_check
        %p193 = pneg %p81
      $region18: #{residual_block.4} parent=11 // pred_check_branch
        %195 = sbr.rel (%p193) target = $region20
      $region19: #{residual_block.4} parent=11 // pred_region
        _
      $region20: #{residual_block.4} parent=11 // pred_fallthru
        _
      // Predicated region
      $region21: #{residual_block.4} parent=11 // pred_check
        %p196 = pneg %p102
      $region22: #{residual_block.4} parent=11 // pred_check_branch
        %198 = sbr.rel (%p196) target = $region24
      $region23: #{residual_block.4} parent=11 // pred_region
        _
      $region24: #{residual_block.4} parent=11 // pred_fallthru
        _
      // Predicated region
      $region25: #{residual_block.4} parent=11 // pred_check
        %p199 = pneg %p123
      $region26: #{residual_block.4} parent=11 // pred_check_branch
        %201 = sbr.rel (%p199) target = $region28
      $region27: #{residual_block.4} parent=11 // pred_region
        _
      $region28: #{residual_block.4} parent=11 // pred_fallthru
        _
    $region12: #{residual_block.4} parent=5 // pred_fallthru
      _
    %p202 = scmp.lt.s32.totalorder %s13, 2
    // Predicated region
    $region29: #{residual_block.4} parent=5 // pred_check
      %p203 = pneg %p202
    $region30: #{residual_block.4} parent=5 // pred_check_branch
      %205 = sbr.rel (%p203) target = $region32
    $region31: #{residual_block.4} parent=5 // pred_region
      // Predicated region
      $region33: #{residual_block.4} parent=31 // pred_check
        %p206 = pneg %p33
      $region34: #{residual_block.4} parent=31 // pred_check_branch
        %208 = sbr.rel (%p206) target = $region36
      $region35: #{residual_block.4} parent=31 // pred_region
        %p209 = scmp.lt.s32.totalorder %s13, 1
        %s210 = scalar_select %p209, %s13, 1
        %s211 = smul.addr %s210, 2
        %s212 = smul.addr %s211, 8
        %s213 = scalar_lea.vmem %s0, %s212
      $region36: #{residual_block.4} parent=31 // pred_fallthru
        _
    $region32: #{residual_block.4} parent=5 // pred_fallthru
      _
    %p214 = scmp.le.s32.totalorder 1, %s13
    %p215 = scmp.lt.s32.totalorder %s13, 3
    %p216 = pnand %p214, %p215
    %p217 = pneg %p216
    // Predicated region
    $region37: #{residual_block.4} parent=5 // pred_check
      _
    $region38: #{residual_block.4} parent=5 // pred_check_branch
      %219 = sbr.rel (%p216) target = $region40
    $region39: #{residual_block.4} parent=5 // pred_region
      %s220 = ssub.s32 %s13, 1
      %p221 = scmp.lt.s32.totalorder %s18, 1
      %s222 = scalar_select %p221, %s18, 1
      %s223 = smul.addr %s222, 2
      %s224 = smul.addr %s223, 8
      %s225 = scalar_lea.vmem %s0, %s224
      %p226 = pneg %p39
      %p227 = pneg %p36
      %p228 = pneg %p60
      %p229 = pneg %p57
      %p230 = pneg %p81
      %p231 = pneg %p78
      %p232 = pneg %p102
      %p233 = pneg %p99
      %p234 = pneg %p123
      %p235 = pneg %p120
      %p236 = pneg %p149
      %p237 = pneg %p146
      %p238 = scmp.lt.s32.totalorder %s18, 1
      %s239 = scalar_select %p238, %s18, 1
      %s240 = smul.addr %s239, 2
      %s241 = smul.addr %s240, 8
      %s242 = scalar_lea.vmem %s5, %s241
      %p243 = pneg %p175
      %p244 = pneg %p172
      %p245 = scmp.lt.s32.totalorder %s18, 1
      %s246 = scalar_select %p245, %s18, 1
      %s247 = smul.addr %s246, 8
      %s248 = scalar_lea.vmem %s6, %s247
      %p249 = scmp.lt.s32.totalorder %s18, 1
      %s250 = scalar_select %p249, %s18, 1
      %s251 = smul.addr %s250, 2
      %s252 = smul.addr %s251, 8
      %s253 = scalar_lea.vmem %s0, %s252
      %p254 = scmp.lt.s32.totalorder %s18, 1
      %s255 = scalar_select %p254, %s18, 1
      %s256 = smul.addr %s255, 2
      %s257 = smul.addr %s256, 8
      %s258 = scalar_lea.vmem %s5, %s257
      %p259 = scmp.lt.s32.totalorder %s18, 1
      %s260 = scalar_select %p259, %s18, 1
      %s261 = smul.addr %s260, 8
      %s262 = scalar_lea.vmem %s6, %s261
      %v263 = vld [vmem:[%s253] sm:$0xff]
      %v264 = vld [vmem:[%s253 + $0x8] sm:$0xff]
      %v265 = vld [vmem:[%s2] sm:$0xff]
      %267 = vset.pattern.permute.xlu0 0
      %268 = vperm.xlu0 %267, %v265
      %v269 = vpop.permute.xlu0 %268
      %v271 = vmul.f32 %v263, %v269
      %v272 = vmul.f32 %v264, %v269
      %v273 = vld [vmem:[%s3] sm:$0xff]
      %275 = vset.pattern.permute.xlu0 0
      %276 = vperm.xlu0 %275, %v273
      %v277 = vpop.permute.xlu0 %276
      %v279 = vadd.f32 %v271, %v277
      %v280 = vadd.f32 %v272, %v277
      %v281 = vmax.f32 %v279, 0.0
      %v282 = vmax.f32 %v280, 0.0
      %283 = vrot.lane.b32.xlu0 %v281, 17
      %v284 = vpop.permute.xlu0 %283
      %285 = vrot.lane.b32.xlu0 %v282, 17
      %v286 = vpop.permute.xlu0 %285
      %v287 = vlaneseq
      %v288 = vand.u32 %v287, 127
      %vm289 = vcmp.lt.s32.totalorder %v288, 17
      %v290 = vsel %vm289, %v284, %v286
      %v291 = vsel %vm289, %v286, %v284
      %v292 = vld [vmem:[%s4] sm:$0x3]
      %v294 = vlaneseq
      %v295 = vshrl.u32 %v294, 7
      %v296 = vsub.s32 0, %v295
      %v297 = vrot.slane %v292, %v296
      %v298 = vlaneseq
      %v299 = vshrl.u32 %v298, 7
      %v300 = vsub.s32 1, %v299
      %v301 = vrot.slane %v292, %v300
      %v304 = vmul.f32 %v291, %v297
      %v305 = vmul.f32 %v290, %v301
      %306 = vrot.lane.b32.xlu0 %v281, 16
      %v307 = vpop.permute.xlu0 %306
      %308 = vrot.lane.b32.xlu0 %v282, 16
      %v309 = vpop.permute.xlu0 %308
      %vm310 = vcmp.lt.s32.totalorder %v288, 16
      %v311 = vsel %vm310, %v307, %v309
      %v312 = vsel %vm310, %v309, %v307
      %s313 = scalar_lea.vmem %s4, 2
      %v314 = vld [vmem:[%s313] sm:$0x3]
      %v316 = vlaneseq
      %v317 = vshrl.u32 %v316, 7
      %v318 = vsub.s32 0, %v317
      %v319 = vrot.slane %v314, %v318
      %v320 = vlaneseq
      %v321 = vshrl.u32 %v320, 7
      %v322 = vsub.s32 1, %v321
      %v323 = vrot.slane %v314, %v322
      %v326 = vmul.f32 %v312, %v319
      %v327 = vmul.f32 %v311, %v323
      %328 = vrot.lane.b32.xlu0 %v281, 15
      %v329 = vpop.permute.xlu0 %328
      %330 = vrot.lane.b32.xlu0 %v282, 15
      %v331 = vpop.permute.xlu0 %330
      %vm332 = vcmp.lt.s32.totalorder %v288, 15
      %v333 = vsel %vm332, %v329, %v331
      %v334 = vsel %vm332, %v331, %v329
      %s335 = scalar_lea.vmem %s4, 4
      %v336 = vld [vmem:[%s335] sm:$0x3]
      %v338 = vlaneseq
      %v339 = vshrl.u32 %v338, 7
      %v340 = vsub.s32 0, %v339
      %v341 = vrot.slane %v336, %v340
      %v342 = vlaneseq
      %v343 = vshrl.u32 %v342, 7
      %v344 = vsub.s32 1, %v343
      %v345 = vrot.slane %v336, %v344
      %v348 = vmul.f32 %v334, %v341
      %v349 = vmul.f32 %v333, %v345
      %350 = vrot.lane.b32.xlu0 %v281, 1
      %v351 = vpop.permute.xlu0 %350
      %352 = vrot.lane.b32.xlu0 %v282, 1
      %v353 = vpop.permute.xlu0 %352
      %vm354 = vcmp.lt.s32.totalorder %v288, 1
      %v355 = vsel %vm354, %v351, %v353
      %v356 = vsel %vm354, %v353, %v351
      %s357 = scalar_lea.vmem %s4, 6
      %v358 = vld [vmem:[%s357] sm:$0x3]
      %v360 = vlaneseq
      %v361 = vshrl.u32 %v360, 7
      %v362 = vsub.s32 0, %v361
      %v363 = vrot.slane %v358, %v362
      %v364 = vlaneseq
      %v365 = vshrl.u32 %v364, 7
      %v366 = vsub.s32 1, %v365
      %v367 = vrot.slane %v358, %v366
      %v370 = vmul.f32 %v356, %v363
      %v371 = vmul.f32 %v355, %v367
      %s372 = scalar_lea.vmem %s4, 8
      %v373 = vld [vmem:[%s372] sm:$0x3]
      %v375 = vlaneseq
      %v376 = vshrl.u32 %v375, 7
      %v377 = vsub.s32 0, %v376
      %v378 = vrot.slane %v373, %v377
      %v379 = vlaneseq
      %v380 = vshrl.u32 %v379, 7
      %v381 = vsub.s32 1, %v380
      %v382 = vrot.slane %v373, %v381
      %v385 = vmul.f32 %v281, %v378
      %v386 = vmul.f32 %v282, %v382
      %387 = vrot.lane.b32.xlu0 %v281, 127
      %v388 = vpop.permute.xlu0 %387
      %389 = vrot.lane.b32.xlu0 %v282, 127
      %v390 = vpop.permute.xlu0 %389
      %vm391 = vcmp.lt.s32.totalorder %v288, 127
      %v392 = vsel %vm391, %v388, %v390
      %v393 = vsel %vm391, %v390, %v388
      %s394 = scalar_lea.vmem %s4, 10
      %v395 = vld [vmem:[%s394] sm:$0x3]
      %v397 = vlaneseq
      %v398 = vshrl.u32 %v397, 7
      %v399 = vsub.s32 0, %v398
      %v400 = vrot.slane %v395, %v399
      %v401 = vlaneseq
      %v402 = vshrl.u32 %v401, 7
      %v403 = vsub.s32 1, %v402
      %v404 = vrot.slane %v395, %v403
      %v407 = vmul.f32 %v392, %v400
      %v408 = vmul.f32 %v393, %v404
      %409 = vrot.lane.b32.xlu0 %v281, 113
      %v410 = vpop.permute.xlu0 %409
      %411 = vrot.lane.b32.xlu0 %v282, 113
      %v412 = vpop.permute.xlu0 %411
      %vm413 = vcmp.lt.s32.totalorder %v288, 113
      %v414 = vsel %vm413, %v410, %v412
      %v415 = vsel %vm413, %v412, %v410
      %s416 = scalar_lea.vmem %s4, 12
      %v417 = vld [vmem:[%s416] sm:$0x3]
      %v419 = vlaneseq
      %v420 = vshrl.u32 %v419, 7
      %v421 = vsub.s32 0, %v420
      %v422 = vrot.slane %v417, %v421
      %v423 = vlaneseq
      %v424 = vshrl.u32 %v423, 7
      %v425 = vsub.s32 1, %v424
      %v426 = vrot.slane %v417, %v425
      %v429 = vmul.f32 %v414, %v422
      %v430 = vmul.f32 %v415, %v426
      %431 = vrot.lane.b32.xlu0 %v281, 112
      %v432 = vpop.permute.xlu0 %431
      %433 = vrot.lane.b32.xlu0 %v282, 112
      %v434 = vpop.permute.xlu0 %433
      %vm435 = vcmp.lt.s32.totalorder %v288, 112
      %v436 = vsel %vm435, %v432, %v434
      %v437 = vsel %vm435, %v434, %v432
      %s438 = scalar_lea.vmem %s4, 14
      %v439 = vld [vmem:[%s438] sm:$0x3]
      %v441 = vlaneseq
      %v442 = vshrl.u32 %v441, 7
      %v443 = vsub.s32 0, %v442
      %v444 = vrot.slane %v439, %v443
      %v445 = vlaneseq
      %v446 = vshrl.u32 %v445, 7
      %v447 = vsub.s32 1, %v446
      %v448 = vrot.slane %v439, %v447
      %v451 = vmul.f32 %v436, %v444
      %v452 = vmul.f32 %v437, %v448
      %453 = vrot.lane.b32.xlu0 %v281, 111
      %v454 = vpop.permute.xlu0 %453
      %455 = vrot.lane.b32.xlu0 %v282, 111
      %v456 = vpop.permute.xlu0 %455
      %vm457 = vcmp.lt.s32.totalorder %v288, 111
      %v458 = vsel %vm457, %v454, %v456
      %v459 = vsel %vm457, %v456, %v454
      %s460 = scalar_lea.vmem %s4, 16
      %v461 = vld [vmem:[%s460] sm:$0x3]
      %v463 = vlaneseq
      %v464 = vshrl.u32 %v463, 7
      %v465 = vsub.s32 0, %v464
      %v466 = vrot.slane %v461, %v465
      %v467 = vlaneseq
      %v468 = vshrl.u32 %v467, 7
      %v469 = vsub.s32 1, %v468
      %v470 = vrot.slane %v461, %v469
      %v473 = vmul.f32 %v458, %v466
      %v474 = vmul.f32 %v459, %v470
      %v475 = vld [vmem:[%s1] sm:$0xff]
      %vm476 = vcmask 588800
      %v478 = vsel %vm476, %v475, 0
      %480 = vmatprep.subr.mxu0 %v305
      %481 = vmatpush1.msra.mxu0 %v304
      %482 = vmatprep.subr.mxu0 %v327
      %483 = vmatpush1.msra.mxu0 %v326
      %484 = vmatprep.subr.mxu0 %v349
      %485 = vmatpush1.msra.mxu0 %v348
      %486 = vmatprep.subr.mxu0 %v371
      %487 = vmatpush1.msra.mxu0 %v370
      %488 = vmatprep.subr.mxu0 %v386
      %489 = vmatpush1.msra.mxu0 %v385
      %490 = vmatprep.subr.mxu0 %v408
      %491 = vmatpush1.msra.mxu0 %v407
      %492 = vmatprep.subr.mxu0 %v430
      %493 = vmatpush1.msra.mxu0 %v429
      %494 = vmatprep.subr.mxu0 %v452
      %495 = vmatpush1.msra.mxu0 %v451
      %496 = vmatprep.subr.mxu0 %v474
      %497 = vmatpush1.msra.mxu0 %v473
      %498 = vmatprep.subr.mxu0 0.0
      %499 = vmatpush1.msra.mxu0 0.0
      %500 = vmatprep.subr.mxu0 0.0
      %501 = vmatpush1.msra.mxu0 0.0
      %502 = vmatprep.subr.mxu0 0.0
      %503 = vmatpush1.msra.mxu0 0.0
      %504 = vmatprep.subr.mxu0 0.0
      %505 = vmatpush1.msra.mxu0 0.0
      %506 = vmatprep.subr.mxu0 0.0
      %507 = vmatpush1.msra.mxu0 0.0
      %508 = vmatprep.subr.mxu0 0.0
      %509 = vmatpush1.msra.mxu0 0.0
      %510 = vmatprep.subr.mxu0 0.0
      %511 = vmatpush1.msra.mxu0 0.0
      %512 = vmatprep.subr.mxu0 0.0
      %513 = vmatpush1.msra.mxu0 0.0
      %514 = vmatprep.subr.mxu0 0.0
      %515 = vmatpush1.msra.mxu0 0.0
      %516 = vmatprep.subr.mxu0 0.0
      %517 = vmatpush1.msra.mxu0 0.0
      %518 = vmatprep.subr.mxu0 0.0
      %519 = vmatpush1.msra.mxu0 0.0
      %520 = vmatprep.subr.mxu0 0.0
      %521 = vmatpush1.msra.mxu0 0.0
      %522 = vmatprep.subr.mxu0 0.0
      %523 = vmatpush1.msra.mxu0 0.0
      %524 = vmatprep.subr.mxu0 0.0
      %525 = vmatpush1.msra.mxu0 0.0
      %526 = vmatprep.subr.mxu0 0.0
      %527 = vmatpush1.msra.mxu0 0.0
      %528 = vmatprep.subr.mxu0 0.0
      %529 = vmatpush1.msra.mxu0 0.0
      %530 = vmatprep.subr.mxu0 0.0
      %531 = vmatpush1.msra.mxu0 0.0
      %532 = vmatprep.subr.mxu0 0.0
      %533 = vmatpush1.msra.mxu0 0.0
      %534 = vmatprep.subr.mxu0 0.0
      %535 = vmatpush1.msra.mxu0 0.0
      %536 = vmatprep.subr.mxu0 0.0
      %537 = vmatpush1.msra.mxu0 0.0
      %538 = vmatprep.subr.mxu0 0.0
      %539 = vmatpush1.msra.mxu0 0.0
      %540 = vmatprep.subr.mxu0 0.0
      %541 = vmatpush1.msra.mxu0 0.0
      %542 = vmatprep.subr.mxu0 0.0
      %543 = vmatpush1.msra.mxu0 0.0
      %544 = vmatprep.mubr.f32.mxu0 0.0
      %545 = vmatmul.mubr.f32.gmra.mrb[0].mxu0 %v478
      %v546 = vpop.f32.mrb[0].mxu0
      %v547 = vadd.f32 0.0, %v546
      %v548 = vpop.f32.mrb[0].mxu0
      %v549 = vadd.f32 0.0, %v548
      %550 = vdwg.mxu0
      %551 = vst [vmem:[%s258] sm:$0xff] %v547
      %552 = vst [vmem:[%s258 + $0x8] sm:$0xff] %v549
      %v553 = vadd.f32 %v547, %v549
      %554 = vadd.xlane.f32.xlu0 %v553
      %v555 = vpop.xlane.xlu0 %554
      %v556 = vmul.f32 %v547, %v547
      %v557 = vmul.f32 %v549, %v549
      %v558 = vadd.f32 %v556, %v557
      %559 = vadd.xlane.f32.xlu0 %v558
      %v560 = vpop.xlane.xlu0 %559
      %vm561 = vcmask 7168
      %v562 = vsel %vm561, %v555, %v560
      %vm563 = vcmask 15360
      %v564 = vsel %vm563, %v562, 0.0
      %565 = vst [vmem:[%s262] sm:$0xff] %v564
      %p566 = scmp.lt.s32.totalorder %s18, 1
      %s567 = scalar_select %p566, %s18, 1
      %s568 = smul.addr %s567, 2
      %s569 = smul.addr %s568, 8
      %s570 = scalar_lea.vmem %s5, %s569
      %p571 = scmp.lt.s32.totalorder %s18, 1
      %s572 = scalar_select %p571, %s18, 1
      %s573 = smul.addr %s572, 8
      %s574 = scalar_lea.vmem %s6, %s573
      // Predicated region
      $region41: #{residual_block.4} parent=39 // pred_check
        %p575 = pneg %p146
      $region42: #{residual_block.4} parent=39 // pred_check_branch
        %577 = sbr.rel (%p575) target = $region44
      $region43: #{residual_block.4} parent=39 // pred_region
        _
      $region44: #{residual_block.4} parent=39 // pred_fallthru
        _
      // Predicated region
      $region45: #{residual_block.4} parent=39 // pred_check
        %p578 = pneg %p172
      $region46: #{residual_block.4} parent=39 // pred_check_branch
        %580 = sbr.rel (%p578) target = $region48
      $region47: #{residual_block.4} parent=39 // pred_region
        _
      $region48: #{residual_block.4} parent=39 // pred_fallthru
        _
    $region40: #{residual_block.4} parent=5 // pred_fallthru
      _
    %p581 = scmp.le.s32.totalorder 2, %s13
    // Predicated region
    $region49: #{residual_block.4} parent=5 // pred_check
      %p582 = pneg %p581
    $region50: #{residual_block.4} parent=5 // pred_check_branch
      %584 = sbr.rel (%p582) target = $region52
    $region51: #{residual_block.4} parent=5 // pred_region
      %s585 = ssub.s32 %s13, 2
      // Predicated region
      $region53: #{residual_block.4} parent=51 // pred_check
        %p586 = pneg %p152
      $region54: #{residual_block.4} parent=51 // pred_check_branch
        %588 = sbr.rel (%p586) target = $region56
      $region55: #{residual_block.4} parent=51 // pred_region
        %p589 = scmp.lt.s32.totalorder %s19, 1
        %s590 = scalar_select %p589, %s19, 1
        %s591 = smul.addr %s590, 2
        %s592 = smul.addr %s591, 8
        %s593 = scalar_lea.vmem %s5, %s592
      $region56: #{residual_block.4} parent=51 // pred_fallthru
        _
      // Predicated region
      $region57: #{residual_block.4} parent=51 // pred_check
        %p594 = pneg %p178
      $region58: #{residual_block.4} parent=51 // pred_check_branch
        %596 = sbr.rel (%p594) target = $region60
      $region59: #{residual_block.4} parent=51 // pred_region
        %p597 = scmp.lt.s32.totalorder %s19, 1
        %s598 = scalar_select %p597, %s19, 1
        %s599 = smul.addr %s598, 8
        %s600 = scalar_lea.vmem %s6, %s599
      $region60: #{residual_block.4} parent=51 // pred_fallthru
        _
    $region52: #{residual_block.4} parent=5 // pred_fallthru
      _
  $region6: #{residual_block.4} parent=0 // loop_footer
    %s17 = sadd.s32 1, %s13
  $region7: #{residual_block.4} parent=0 // loop_footer_branch
    %12 = sbr.rel target = $region3
  $region8: #{residual_block.4} parent=0 // loop_exit
    _

</llo_original>
